<compile_context>
chip_gen: v5e
topology: v5e:2x2
jax: 0.10.0
libtpu: 0.0.40
codegen_flags: <defaults>
</compile_context>

<pallas_src>
import functools

import jax
import jax.numpy as jnp
from jax.experimental import pallas as pl
from jax.experimental.pallas import tpu as pltpu


def _pixel_unshuffle_kernel(x_ref, o_ref, *, r, oh_blk, out_w):
    # x_ref: (c_blk, h_blk, W)            with h_blk = oh_blk * r, W = out_w * r
    # o_ref: (c_blk, r*r, oh_blk, out_w)
    c_blk = x_ref.shape[0]
    for i in range(r):
        # Strided sublane read of rows i, i+r, i+2r, ... -> (c_blk, oh_blk, W).
        # Lane dim (W) is loaded dense with unit stride.
        xi = x_ref[:, pl.ds(i, oh_blk, stride=r), :]
        # Split lanes W -> (out_w, r); this is the only in-core relayout.
        xir = xi.reshape(c_blk, oh_blk, out_w, r)
        for j in range(r):
            # One contiguous slab store per derived channel i*r + j.
            o_ref[:, i * r + j] = xir[:, :, :, j]


def _round_up(x, m):
    return -(-x // m) * m


def _choose_blocks(bc, h, w, r, itemsize, *, target_bytes=4 * 1024 * 1024,
                   min_steps=8):
    """Pick (c_blk, h_blk) using padded (tile-rounded) VMEM footprints.

    - Budget ~2*target_bytes for one input block + its output block, with the
      last dim rounded up to 128 lanes and the second-to-last to the sublane
      tile (so narrow W / out_w inflation is accounted for).
    - h_blk is either the full H or a multiple of r*sublane (keeps oh_blk
      sublane-aligned); non-divisor h_blk is allowed (ragged cdiv grid).
    - Cap the block so the grid has >= min_steps steps when that keeps blocks
      above ~budget/min_steps, and always >= 2 steps when possible (v7x
      megacore: all axes are "parallel" and shard across the two TCs).
    """
    sublane = {4: 8, 2: 16, 1: 32}.get(itemsize, 8)
    lane = 128
    step = r * sublane  # row granularity that keeps oh_blk sublane-aligned

    def plane_bytes(rows):
        # Padded VMEM bytes (input block + output block) per input channel
        # for a block of `rows` input rows.
        inp = _round_up(rows, sublane) * _round_up(w, lane) * itemsize
        out = (r * r * _round_up(max(rows // r, 1), sublane)
               * _round_up(w // r, lane) * itemsize)
        return inp + out

    budget = 2 * target_bytes

    if plane_bytes(h) <= budget:
        h_blk = h
        cap = max(1, budget // plane_bytes(h))
        c_blk = max(d for d in range(1, bc + 1) if bc % d == 0 and d <= cap)
    else:
        c_blk = 1
        per_chunk = plane_bytes(step)               # exact for step multiples
        rows = max(step, (budget // per_chunk) * step)
        rows = min(rows, _round_up(h, step))
        # Prefer an aligned divisor of H (no ragged tail); otherwise take the
        # largest aligned row count and let the grid be ragged (cdiv + clip).
        divs = [k for k in range(step, rows + 1, step) if h % k == 0]
        h_blk = max(divs) if divs else rows

    def n_steps(cb, hb):
        return (bc // cb) * (-(-h // hb))

    def smaller_divisor(n, d):
        cands = [k for k in range(1, d) if n % k == 0]
        return max(cands) if cands else 1

    # Phase 1: aim for min_steps while blocks stay reasonably large.
    floor_bytes = budget // min_steps
    while n_steps(c_blk, h_blk) < min_steps and c_blk > 1:
        nxt = smaller_divisor(bc, c_blk)
        if nxt * plane_bytes(h_blk) < floor_bytes:
            break
        c_blk = nxt

    # Phase 2: always give the v7x megacore at least 2 steps when possible.
    while n_steps(c_blk, h_blk) < 2 and c_blk > 1:
        c_blk = smaller_divisor(bc, c_blk)
    if n_steps(c_blk, h_blk) < 2 and h_blk == h and h >= 2 * step:
        h_blk = _round_up(-(-h // 2), step)

    return c_blk, h_blk


def pixel_unshuffle(x, downscale_factor=2):
    b, c, h, w = x.shape
    r = int(downscale_factor)
    assert h % r == 0 and w % r == 0, "H and W must be divisible by r"
    out_h, out_w = h // r, w // r
    bc = b * c

    # Free major-dim fold: (B, C, H, W) -> (B*C, H, W).
    x2 = x.reshape(bc, h, w)

    itemsize = jnp.dtype(x.dtype).itemsize
    c_blk, h_blk = _choose_blocks(bc, h, w, r, itemsize)
    oh_blk = h_blk // r

    kernel = functools.partial(
        _pixel_unshuffle_kernel, r=r, oh_blk=oh_blk, out_w=out_w)

    grid = (bc // c_blk, pl.cdiv(h, h_blk))

    out = pl.pallas_call(
        kernel,
        out_shape=jax.ShapeDtypeStruct((bc, r * r, out_h, out_w), x.dtype),
        grid_spec=pltpu.PrefetchScalarGridSpec(
            num_scalar_prefetch=0,
            grid=grid,
            in_specs=[
                pl.BlockSpec((c_blk, h_blk, w), lambda ci, hi: (ci, hi, 0)),
            ],
            out_specs=pl.BlockSpec((c_blk, r * r, oh_blk, out_w),
                                   lambda ci, hi: (ci, 0, hi, 0)),
        ),
        compiler_params=pltpu.CompilerParams(
            dimension_semantics=("parallel", "parallel"),
            vmem_limit_bytes=48 * 1024 * 1024,
        ),
    )(x2)

    # Free major-dim merges: (B*C, r*r, OH, OW) -> (B, C*r*r, OH, OW).
    return out.reshape(b, c * r * r, out_h, out_w)


def _pixel_unshuffle_ref(x, r):
    b, c, h, w = x.shape
    oh, ow = h // r, w // r
    xv = x.reshape(b, c, oh, r, ow, r)
    return jnp.transpose(xv, (0, 1, 3, 5, 2, 4)).reshape(b, c * r * r, oh, ow)


if __name__ == "__main__":
    key = jax.random.PRNGKey(0)

    # Primary case (matches the module's intended use).
    x = jax.random.normal(key, (2, 4, 16, 16), dtype=jnp.float32)
    out = jax.block_until_ready(pixel_unshuffle(x, downscale_factor=2))
    ref = _pixel_unshuffle_ref(x, 2)
    assert out.shape == (2, 16, 8, 8), out.shape
    assert jnp.array_equal(out, ref), "mismatch vs reference (r=2)"

    # Odd channel count + r=4 exercises the B*C fold and the general i/j loop.
    x2 = jax.random.normal(jax.random.PRNGKey(1), (1, 3, 24, 40),
                           dtype=jnp.float32)
    out2 = jax.block_until_ready(pixel_unshuffle(x2, downscale_factor=4))
    ref2 = _pixel_unshuffle_ref(x2, 4)
    assert out2.shape == (1, 48, 6, 10), out2.shape
    assert jnp.array_equal(out2, ref2), "mismatch vs reference (r=4)"

    print("KERNEL_OK")
</pallas_src>

<mosaic_0001>
module attributes {stable_mosaic.version = 11 : i64} {
  func.func @_pixel_unshuffle_kernel(%arg0: i32, %arg1: i32, %arg2: memref<4x16x16xf32, #tpu.memory_space<vmem>>, %arg3: memref<4x4x8x8xf32, #tpu.memory_space<vmem>>) attributes {dimension_semantics = [#tpu.dimension_semantics<parallel>, #tpu.dimension_semantics<parallel>], iteration_bounds = array<i64: 2, 1>, scalar_prefetch = 0 : i64, scratch_operands = 0 : i64, tpu.core_type = #tpu.core_type<tc>, window_params = [{transform_indices = @transform_0, window_bounds = array<i64: 4, 16, 16>}, {transform_indices = @transform_1, window_bounds = array<i64: 4, 4, 8, 8>}]} {
    %c0 = arith.constant 0 : index
    %c0_0 = arith.constant 0 : index
    %c0_1 = arith.constant 0 : index
    %0 = tpu.strided_load %arg2[%c0, %c0_0, %c0_1] {strides = array<i32: 1, 2, 1>} : memref<4x16x16xf32, #tpu.memory_space<vmem>>, vector<4x8x16xf32>
    %1 = vector.shape_cast %0 : vector<4x8x16xf32> to vector<4x8x8x2xf32>
    %2 = vector.extract_strided_slice %1 {offsets = [0, 0, 0, 0], sizes = [4, 8, 8, 1], strides = [1, 1, 1, 1]} : vector<4x8x8x2xf32> to vector<4x8x8x1xf32>
    %3 = vector.shape_cast %2 : vector<4x8x8x1xf32> to vector<4x8x8xf32>
    %c0_2 = arith.constant 0 : index
    %c0_3 = arith.constant 0 : index
    %c0_4 = arith.constant 0 : index
    %c0_5 = arith.constant 0 : index
    %4 = vector.load %arg3[%c0_2, %c0_3, %c0_4, %c0_5] : memref<4x4x8x8xf32, #tpu.memory_space<vmem>>, vector<4x1x8x8xf32>
    %5 = vector.shape_cast %4 : vector<4x1x8x8xf32> to vector<4x8x8xf32>
    %6 = vector.shape_cast %3 : vector<4x8x8xf32> to vector<4x1x8x8xf32>
    tpu.vector_store %arg3[%c0_2, %c0_3, %c0_4, %c0_5], %6 {strides = array<i32>} : memref<4x4x8x8xf32, #tpu.memory_space<vmem>>, vector<4x1x8x8xf32>,
    %7 = vector.extract_strided_slice %1 {offsets = [0, 0, 0, 1], sizes = [4, 8, 8, 1], strides = [1, 1, 1, 1]} : vector<4x8x8x2xf32> to vector<4x8x8x1xf32>
    %8 = vector.shape_cast %7 : vector<4x8x8x1xf32> to vector<4x8x8xf32>
    %c0_6 = arith.constant 0 : index
    %c1 = arith.constant 1 : index
    %c0_7 = arith.constant 0 : index
    %c0_8 = arith.constant 0 : index
    %9 = vector.load %arg3[%c0_6, %c1, %c0_7, %c0_8] : memref<4x4x8x8xf32, #tpu.memory_space<vmem>>, vector<4x1x8x8xf32>
    %10 = vector.shape_cast %9 : vector<4x1x8x8xf32> to vector<4x8x8xf32>
    %11 = vector.shape_cast %8 : vector<4x8x8xf32> to vector<4x1x8x8xf32>
    tpu.vector_store %arg3[%c0_6, %c1, %c0_7, %c0_8], %11 {strides = array<i32>} : memref<4x4x8x8xf32, #tpu.memory_space<vmem>>, vector<4x1x8x8xf32>,
    %c0_9 = arith.constant 0 : index
    %c1_10 = arith.constant 1 : index
    %c0_11 = arith.constant 0 : index
    %12 = tpu.strided_load %arg2[%c0_9, %c1_10, %c0_11] {strides = array<i32: 1, 2, 1>} : memref<4x16x16xf32, #tpu.memory_space<vmem>>, vector<4x8x16xf32>
    %13 = vector.shape_cast %12 : vector<4x8x16xf32> to vector<4x8x8x2xf32>
    %14 = vector.extract_strided_slice %13 {offsets = [0, 0, 0, 0], sizes = [4, 8, 8, 1], strides = [1, 1, 1, 1]} : vector<4x8x8x2xf32> to vector<4x8x8x1xf32>
    %15 = vector.shape_cast %14 : vector<4x8x8x1xf32> to vector<4x8x8xf32>
    %c0_12 = arith.constant 0 : index
    %c2 = arith.constant 2 : index
    %c0_13 = arith.constant 0 : index
    %c0_14 = arith.constant 0 : index
    %16 = vector.load %arg3[%c0_12, %c2, %c0_13, %c0_14] : memref<4x4x8x8xf32, #tpu.memory_space<vmem>>, vector<4x1x8x8xf32>
    %17 = vector.shape_cast %16 : vector<4x1x8x8xf32> to vector<4x8x8xf32>
    %18 = vector.shape_cast %15 : vector<4x8x8xf32> to vector<4x1x8x8xf32>
    tpu.vector_store %arg3[%c0_12, %c2, %c0_13, %c0_14], %18 {strides = array<i32>} : memref<4x4x8x8xf32, #tpu.memory_space<vmem>>, vector<4x1x8x8xf32>,
    %19 = vector.extract_strided_slice %13 {offsets = [0, 0, 0, 1], sizes = [4, 8, 8, 1], strides = [1, 1, 1, 1]} : vector<4x8x8x2xf32> to vector<4x8x8x1xf32>
    %20 = vector.shape_cast %19 : vector<4x8x8x1xf32> to vector<4x8x8xf32>
    %c0_15 = arith.constant 0 : index
    %c3 = arith.constant 3 : index
    %c0_16 = arith.constant 0 : index
    %c0_17 = arith.constant 0 : index
    %21 = vector.load %arg3[%c0_15, %c3, %c0_16, %c0_17] : memref<4x4x8x8xf32, #tpu.memory_space<vmem>>, vector<4x1x8x8xf32>
    %22 = vector.shape_cast %21 : vector<4x1x8x8xf32> to vector<4x8x8xf32>
    %23 = vector.shape_cast %20 : vector<4x8x8xf32> to vector<4x1x8x8xf32>
    tpu.vector_store %arg3[%c0_15, %c3, %c0_16, %c0_17], %23 {strides = array<i32>} : memref<4x4x8x8xf32, #tpu.memory_space<vmem>>, vector<4x1x8x8xf32>,
    return
  }
  func.func @transform_0(%arg0: i32, %arg1: i32) -> (i32, i32, i32) {
    %c0_i32 = arith.constant 0 : i32
    %c0_i32_0 = arith.constant 0 : i32
    return %arg0, %arg1, %c0_i32 : i32, i32, i32
  }
  func.func @transform_1(%arg0: i32, %arg1: i32) -> (i32, i32, i32, i32) {
    %c0_i32 = arith.constant 0 : i32
    %c0_i32_0 = arith.constant 0 : i32
    %c0_i32_1 = arith.constant 0 : i32
    return %arg0, %c0_i32, %arg1, %c0_i32_0 : i32, i32, i32, i32
  }
}

</mosaic_0001>

<llo_original>
// kernel: tpu_custom_call.1
$region0: #{tpu_custom_call.1}
  #allocation0 [shape = 'u32[]', space=smem, size = 0x4, offset = 0x4, fixed_abs, tag = 'smem constant byte address 0x4 - core index']
  #allocation1 [shape = 'u32[72,128]{1,0:T(1,128)}', space=vmem, size = 0x9000, scoped, tag = 'internal scratch']
  %s0 = inlined_call_operand.hbm [shape: f32[8,16,16], index: 0, kind: input, shape index: {}]
  %s1 = inlined_call_operand.hbm [shape: f32[8,4,8,8], index: 1, kind: output, shape index: {}]
  %s2 = sld [smem:[#allocation0]]
  $region41: #{tpu_custom_call.1} parent=0
    _
  %s4 = ssub.s32 1, %s2
  %s5 = scalar_select 0, %s4, %s2
  $region1: #{tpu_custom_call.1} parent=0
    #allocation2 [shape = 'u8[65536]{0}', space=vmem, size = 0x10000, scoped, tag = 'input window, operand 0']
    #allocation3 [shape = 's32[2]{0}', space=sflag, size = 0x8, scoped, tag = 'scoped memory for tpu_custom_call.1']
    #allocation4 [shape = 's32[2]{0}', space=sflag, size = 0x8, scoped, tag = 'scoped memory for tpu_custom_call.1']
    #allocation5 [shape = 'u8[131072]{0}', space=vmem, size = 0x20000, scoped, tag = 'output window, operand 0']
    %6 = vsyncpa [#allocation3], 0
    %s7 = scalar_lea.sflag [#allocation3], 1
    %8 = vsyncpa %s7, 0
    %9 = vsyncpa [#allocation4], 0
    %s10 = scalar_lea.sflag [#allocation4], 1
    %11 = vsyncpa %s10, 0
    loop: start=0, step=1, limit=4
    $region2: #{tpu_custom_call.1} parent=1 // loop_pre_header
      _
    $region3: #{tpu_custom_call.1} parent=1 // loop_header
      %s13 = sphi 0, %s17
      %p14 = scmp.ge.s32.totalorder %s13, 4
      %s20 = sphi 0, %s32
      %s21 = sphi 0, %s28
      %s22 = sphi 0, %s20
      %s23 = sphi 0, %s21
      %s24 = sphi 0, %s22
      %s25 = sphi 0, %s23
      %s37 = sphi 0, %s39
      %s40 = sphi 0, %s37
      %s41 = sphi 0, %s40
      %s57 = sphi 0, %s41
      %s65 = sphi 0, %s67
      %s68 = sphi 0, %s65
      %s69 = sphi 0, %s68
      %s85 = sphi 0, %s69
    $region4: #{tpu_custom_call.1} parent=1 // loop_header_branch
      %16 = sbr.rel (%p14) target = $region8
    $region5: #{tpu_custom_call.1} parent=1 // loop_body
      %s18 = ssub.s32 %s13, 1
      %s19 = ssub.s32 %s13, 2
      %s26 = sadd.s32 1, %s21
      %p27 = scmp.ge.s32.totalorder %s26, 1
      %s28 = scalar_select %p27, 0, %s26
      %s29 = sadd.s32 1, %s20
      %s30 = scalar_select %p27, %s29, %s20
      %p31 = scmp.ge.s32.totalorder %s30, 2
      %s32 = scalar_select %p31, 0, %s30
      %s33 = ssub.s32 %s20, %s32
      %s34 = ssub.s32 %s21, %s28
      %s35 = sor.u32 %s33, %s34
      %p36 = scmp.eq.s32.totalorder %s35, 0
      %s38 = sadd.s32 %s37, 1
      %s39 = scalar_select %p36, %s37, %s38
      %p42 = pneg %p36
      %p43 = scmp.eq.s32.totalorder %s13, 1
      %p44 = por %p42, %p43
      %p45 = scmp.ne.s32.totalorder %s37, %s40
      %p46 = scmp.eq.s32.totalorder %s13, 0
      %p47 = por %p45, %p46
      %p48 = scmp.ne.s32.totalorder %s37, %s40
      %p49 = scmp.eq.s32.totalorder %s18, 1
      %p50 = por %p48, %p49
      %p51 = scmp.ne.s32.totalorder %s40, %s41
      %p52 = scmp.eq.s32.totalorder %s18, 0
      %p53 = por %p51, %p52
      %p54 = scmp.ne.s32.totalorder %s40, %s41
      %p55 = scmp.eq.s32.totalorder %s19, 1
      %p56 = por %p54, %p55
      %p58 = scmp.ne.s32.totalorder %s41, %s57
      %p59 = scmp.eq.s32.totalorder %s19, 0
      %p60 = por %p58, %p59
      %s61 = ssub.s32 %s20, %s32
      %s62 = ssub.s32 %s21, %s28
      %s63 = sor.u32 %s61, %s62
      %p64 = scmp.eq.s32.totalorder %s63, 0
      %s66 = sadd.s32 %s65, 1
      %s67 = scalar_select %p64, %s65, %s66
      %p70 = pneg %p64
      %p71 = scmp.eq.s32.totalorder %s13, 1
      %p72 = por %p70, %p71
      %p73 = scmp.ne.s32.totalorder %s65, %s68
      %p74 = scmp.eq.s32.totalorder %s13, 0
      %p75 = por %p73, %p74
      %p76 = scmp.ne.s32.totalorder %s65, %s68
      %p77 = scmp.eq.s32.totalorder %s18, 1
      %p78 = por %p76, %p77
      %p79 = scmp.ne.s32.totalorder %s68, %s69
      %p80 = scmp.eq.s32.totalorder %s18, 0
      %p81 = por %p79, %p80
      %p82 = scmp.ne.s32.totalorder %s68, %s69
      %p83 = scmp.eq.s32.totalorder %s19, 1
      %p84 = por %p82, %p83
      %p86 = scmp.ne.s32.totalorder %s69, %s85
      %p87 = scmp.eq.s32.totalorder %s19, 0
      %p88 = por %p86, %p87
      %p89 = scmp.le.s32.totalorder 1, %s13
      %p90 = scmp.lt.s32.totalorder %s13, 3
      %p91 = pnand %p89, %p90
      %p92 = pneg %p91
      // Predicated region
      $region9: #{tpu_custom_call.1} parent=5 // pred_check
        _
      $region10: #{tpu_custom_call.1} parent=5 // pred_check_branch
        %94 = sbr.rel (%p91) target = $region12
      $region11: #{tpu_custom_call.1} parent=5 // pred_region
        %s95 = ssub.s32 %s13, 1
      $region12: #{tpu_custom_call.1} parent=5 // pred_fallthru
        _
      %p96 = scmp.lt.s32.totalorder %s13, 2
      // Predicated region
      $region13: #{tpu_custom_call.1} parent=5 // pred_check
        %p97 = pneg %p96
      $region14: #{tpu_custom_call.1} parent=5 // pred_check_branch
        %99 = sbr.rel (%p97) target = $region16
      $region15: #{tpu_custom_call.1} parent=5 // pred_region
        // Predicated region
        $region17: #{tpu_custom_call.1} parent=15 // pred_check
          %p100 = pneg %p47
        $region18: #{tpu_custom_call.1} parent=15 // pred_check_branch
          %102 = sbr.rel (%p100) target = $region20
        $region19: #{tpu_custom_call.1} parent=15 // pred_region
          %s103 = sand.u32 %s37, 1
          %s104 = scalar_lea.sflag [#allocation3], %s103
          %s105 = sand.u32 %s37, 1
          %s106 = smul.addr %s105, 64
          %s107 = scalar_lea.vmem [#allocation2], %s106
          %s108 = smul.u32 4, %s20
          %s109 = smul.u32 2, %s21
          %111 = vsyncadd %s104, 0
          %s112 = smul.addr %s108, 2
          %s113 = sadd.s32 %s109, %s112
          %s114 = smul.addr %s113, 8
          %s115 = scalar_lea.hbm %s0, %s114
          %s116 = sshll.u32 %s115, 4
          %s117 = int_to_ptr.hbm [resolvable:$true] %s116
          %s118 = sshll.u32 %s107, 4
          %s119 = int_to_ptr.vmem [resolvable:$true] %s118
          %124 = dma.hbm_to_vmem [thread:$0]  %s117, 1024, %s119, %s104, 128, 128, 8
        $region20: #{tpu_custom_call.1} parent=15 // pred_fallthru
          _
      $region16: #{tpu_custom_call.1} parent=5 // pred_fallthru
        _
      %p125 = scmp.le.s32.totalorder 1, %s13
      %p126 = scmp.lt.s32.totalorder %s13, 3
      %p127 = pnand %p125, %p126
      %p128 = pneg %p127
      // Predicated region
      $region21: #{tpu_custom_call.1} parent=5 // pred_check
        _
      $region22: #{tpu_custom_call.1} parent=5 // pred_check_branch
        %130 = sbr.rel (%p127) target = $region24
      $region23: #{tpu_custom_call.1} parent=5 // pred_region
        %s131 = ssub.s32 %s13, 1
        %s132 = sand.u32 %s40, 1
        %s133 = scalar_lea.sflag [#allocation3], %s132
        %s134 = sand.u32 %s40, 1
        %s135 = smul.addr %s134, 64
        %s136 = scalar_lea.vmem [#allocation2], %s135
        // Predicated region
        $region25: #{tpu_custom_call.1} parent=23 // pred_check
          %p137 = pneg %p53
        $region26: #{tpu_custom_call.1} parent=23 // pred_check_branch
          %139 = sbr.rel (%p137) target = $region28
        $region27: #{tpu_custom_call.1} parent=23 // pred_region
          %141 = dma.done %s133, 1024
        $region28: #{tpu_custom_call.1} parent=23 // pred_fallthru
          _
        %s142 = sand.u32 %s40, 1
        %s143 = scalar_lea.sflag [#allocation3], %s142
        %s144 = sand.u32 %s40, 1
        %s145 = smul.addr %s144, 64
        %s146 = scalar_lea.vmem [#allocation2], %s145
        %p147 = pneg %p53
        %p148 = pneg %p50
        %p149 = pneg %p81
        %p150 = pneg %p78
        %s151 = sand.u32 %s68, 1
        %s152 = scalar_lea.sflag [#allocation4], %s151
        %s153 = sand.u32 %s68, 1
        %s154 = smul.addr %s153, 128
        %s155 = scalar_lea.vmem [#allocation5], %s154
        %s156 = smul.u32 4, %s22
        %s157 = smul.u32 2, %s23
        %s158 = smul.u32 4, %s22
        %v159 = vld [vmem:[%s136] ss:$2 sm:$0xff]
        %s160 = scalar_lea.vmem %s136, 16 [#allocation2]
        %v161 = vld [vmem:[%s160] ss:$2 sm:$0xff]
        %s162 = scalar_lea.vmem %s136, 32 [#allocation2]
        %v163 = vld [vmem:[%s162] ss:$2 sm:$0xff]
        %s164 = scalar_lea.vmem %s136, 48 [#allocation2]
        %v165 = vld [vmem:[%s164] ss:$2 sm:$0xff]
        %170 = vrot.lane.b32.xlu0 %v159, 126
        %v171 = vpop.permute.xlu0 %170
        %172 = vrot.lane.b32.xlu0 %v161, 126
        %v173 = vpop.permute.xlu0 %172
        %174 = vrot.lane.b32.xlu0 %v163, 126
        %v175 = vpop.permute.xlu0 %174
        %176 = vrot.lane.b32.xlu0 %v165, 126
        %v177 = vpop.permute.xlu0 %176
        %182 = vrot.lane.b32.xlu0 %v159, 124
        %v183 = vpop.permute.xlu0 %182
        %184 = vrot.lane.b32.xlu0 %v161, 124
        %v185 = vpop.permute.xlu0 %184
        %186 = vrot.lane.b32.xlu0 %v163, 124
        %v187 = vpop.permute.xlu0 %186
        %188 = vrot.lane.b32.xlu0 %v165, 124
        %v189 = vpop.permute.xlu0 %188
        %194 = vrot.lane.b32.xlu0 %v159, 122
        %v195 = vpop.permute.xlu0 %194
        %196 = vrot.lane.b32.xlu0 %v161, 122
        %v197 = vpop.permute.xlu0 %196
        %198 = vrot.lane.b32.xlu0 %v163, 122
        %v199 = vpop.permute.xlu0 %198
        %200 = vrot.lane.b32.xlu0 %v165, 122
        %v201 = vpop.permute.xlu0 %200
        %206 = vrot.lane.b32.xlu0 %v159, 120
        %v207 = vpop.permute.xlu0 %206
        %208 = vrot.lane.b32.xlu0 %v161, 120
        %v209 = vpop.permute.xlu0 %208
        %210 = vrot.lane.b32.xlu0 %v163, 120
        %v211 = vpop.permute.xlu0 %210
        %212 = vrot.lane.b32.xlu0 %v165, 120
        %v213 = vpop.permute.xlu0 %212
        %218 = vrot.lane.b32.xlu0 %v159, 118
        %v219 = vpop.permute.xlu0 %218
        %220 = vrot.lane.b32.xlu0 %v161, 118
        %v221 = vpop.permute.xlu0 %220
        %222 = vrot.lane.b32.xlu0 %v163, 118
        %v223 = vpop.permute.xlu0 %222
        %224 = vrot.lane.b32.xlu0 %v165, 118
        %v225 = vpop.permute.xlu0 %224
        %230 = vrot.lane.b32.xlu0 %v159, 116
        %v231 = vpop.permute.xlu0 %230
        %232 = vrot.lane.b32.xlu0 %v161, 116
        %v233 = vpop.permute.xlu0 %232
        %234 = vrot.lane.b32.xlu0 %v163, 116
        %v235 = vpop.permute.xlu0 %234
        %236 = vrot.lane.b32.xlu0 %v165, 116
        %v237 = vpop.permute.xlu0 %236
        %242 = vrot.lane.b32.xlu0 %v159, 114
        %v243 = vpop.permute.xlu0 %242
        %244 = vrot.lane.b32.xlu0 %v161, 114
        %v245 = vpop.permute.xlu0 %244
        %246 = vrot.lane.b32.xlu0 %v163, 114
        %v247 = vpop.permute.xlu0 %246
        %248 = vrot.lane.b32.xlu0 %v165, 114
        %v249 = vpop.permute.xlu0 %248
        %v254 = vrot.slane %v183, 4
        %vm255 = vcmask 1047556
        %v256 = vsel %vm255, %v254, %v159
        %v257 = vrot.slane %v159, 4
        %v258 = vsel %vm255, %v183, %v257
        %v260 = vunpack.c.l.s4 1983009808
        %v261 = vunpack.c.0.s8 %v260
        %v262 = vperm.slane %v256, %v261
        %v264 = vunpack.c.l.s4 1983009808
        %v265 = vunpack.c.0.s8 %v264
        %v266 = vperm.slane %v258, %v265
        %v267 = vrot.slane %v195, 4
        %v268 = vsel %vm255, %v267, %v171
        %v269 = vrot.slane %v171, 4
        %v270 = vsel %vm255, %v195, %v269
        %v272 = vunpack.c.l.s4 1983009808
        %v273 = vunpack.c.0.s8 %v272
        %v274 = vperm.slane %v268, %v273
        %v276 = vunpack.c.l.s4 1983009808
        %v277 = vunpack.c.0.s8 %v276
        %v278 = vperm.slane %v270, %v277
        %v279 = vrot.slane %v231, 4
        %v280 = vsel %vm255, %v279, %v207
        %v281 = vrot.slane %v207, 4
        %v282 = vsel %vm255, %v231, %v281
        %v284 = vunpack.c.l.s4 1983009808
        %v285 = vunpack.c.0.s8 %v284
        %v286 = vperm.slane %v280, %v285
        %v288 = vunpack.c.l.s4 1983009808
        %v289 = vunpack.c.0.s8 %v288
        %v290 = vperm.slane %v282, %v289
        %v291 = vrot.slane %v243, 4
        %v292 = vsel %vm255, %v291, %v219
        %v293 = vrot.slane %v219, 4
        %v294 = vsel %vm255, %v243, %v293
        %v296 = vunpack.c.l.s4 1983009808
        %v297 = vunpack.c.0.s8 %v296
        %v298 = vperm.slane %v292, %v297
        %v300 = vunpack.c.l.s4 1983009808
        %v301 = vunpack.c.0.s8 %v300
        %v302 = vperm.slane %v294, %v301
        %v303 = vrot.slane %v274, 4
        %v304 = vsel %vm255, %v303, %v262
        %v305 = vrot.slane %v262, 4
        %v306 = vsel %vm255, %v274, %v305
        %v308 = vunpack.c.l.s4 1934713408
        %v309 = vunpack.c.0.s8 %v308
        %v310 = vperm.slane %v304, %v309
        %v312 = vunpack.c.l.s4 1934713408
        %v313 = vunpack.c.0.s8 %v312
        %v314 = vperm.slane %v306, %v313
        %v315 = vrot.slane %v278, 4
        %v316 = vsel %vm255, %v315, %v266
        %v317 = vrot.slane %v266, 4
        %v318 = vsel %vm255, %v278, %v317
        %v320 = vunpack.c.l.s4 1934713408
        %v321 = vunpack.c.0.s8 %v320
        %v322 = vperm.slane %v316, %v321
        %v324 = vunpack.c.l.s4 1934713408
        %v325 = vunpack.c.0.s8 %v324
        %v326 = vperm.slane %v318, %v325
        %v327 = vrot.slane %v298, 4
        %v328 = vsel %vm255, %v327, %v286
        %v329 = vrot.slane %v286, 4
        %v330 = vsel %vm255, %v298, %v329
        %v332 = vunpack.c.l.s4 1934713408
        %v333 = vunpack.c.0.s8 %v332
        %v334 = vperm.slane %v328, %v333
        %v336 = vunpack.c.l.s4 1934713408
        %v337 = vunpack.c.0.s8 %v336
        %v338 = vperm.slane %v330, %v337
        %v339 = vrot.slane %v302, 4
        %v340 = vsel %vm255, %v339, %v290
        %v341 = vrot.slane %v290, 4
        %v342 = vsel %vm255, %v302, %v341
        %v344 = vunpack.c.l.s4 1934713408
        %v345 = vunpack.c.0.s8 %v344
        %v346 = vperm.slane %v340, %v345
        %v348 = vunpack.c.l.s4 1934713408
        %v349 = vunpack.c.0.s8 %v348
        %v350 = vperm.slane %v342, %v349
        %v351 = vrot.slane %v334, 4
        %v352 = vsel %vm255, %v351, %v310
        %v353 = vrot.slane %v310, 4
        %v354 = vsel %vm255, %v334, %v353
        %v355 = vrot.slane %v338, 4
        %v356 = vsel %vm255, %v355, %v314
        %v357 = vrot.slane %v314, 4
        %v358 = vsel %vm255, %v338, %v357
        %v359 = vrot.slane %v346, 4
        %v360 = vsel %vm255, %v359, %v322
        %v361 = vrot.slane %v322, 4
        %v362 = vsel %vm255, %v346, %v361
        %v363 = vrot.slane %v350, 4
        %v364 = vsel %vm255, %v363, %v326
        %v365 = vrot.slane %v326, 4
        %v366 = vsel %vm255, %v350, %v365
        %v367 = vrot.slane %v185, 4
        %v368 = vsel %vm255, %v367, %v161
        %v369 = vrot.slane %v161, 4
        %v370 = vsel %vm255, %v185, %v369
        %v372 = vunpack.c.l.s4 1983009808
        %v373 = vunpack.c.0.s8 %v372
        %v374 = vperm.slane %v368, %v373
        %v376 = vunpack.c.l.s4 1983009808
        %v377 = vunpack.c.0.s8 %v376
        %v378 = vperm.slane %v370, %v377
        %v379 = vrot.slane %v197, 4
        %v380 = vsel %vm255, %v379, %v173
        %v381 = vrot.slane %v173, 4
        %v382 = vsel %vm255, %v197, %v381
        %v384 = vunpack.c.l.s4 1983009808
        %v385 = vunpack.c.0.s8 %v384
        %v386 = vperm.slane %v380, %v385
        %v388 = vunpack.c.l.s4 1983009808
        %v389 = vunpack.c.0.s8 %v388
        %v390 = vperm.slane %v382, %v389
        %v391 = vrot.slane %v233, 4
        %v392 = vsel %vm255, %v391, %v209
        %v393 = vrot.slane %v209, 4
        %v394 = vsel %vm255, %v233, %v393
        %v396 = vunpack.c.l.s4 1983009808
        %v397 = vunpack.c.0.s8 %v396
        %v398 = vperm.slane %v392, %v397
        %v400 = vunpack.c.l.s4 1983009808
        %v401 = vunpack.c.0.s8 %v400
        %v402 = vperm.slane %v394, %v401
        %v403 = vrot.slane %v245, 4
        %v404 = vsel %vm255, %v403, %v221
        %v405 = vrot.slane %v221, 4
        %v406 = vsel %vm255, %v245, %v405
        %v408 = vunpack.c.l.s4 1983009808
        %v409 = vunpack.c.0.s8 %v408
        %v410 = vperm.slane %v404, %v409
        %v412 = vunpack.c.l.s4 1983009808
        %v413 = vunpack.c.0.s8 %v412
        %v414 = vperm.slane %v406, %v413
        %v415 = vrot.slane %v386, 4
        %v416 = vsel %vm255, %v415, %v374
        %v417 = vrot.slane %v374, 4
        %v418 = vsel %vm255, %v386, %v417
        %v420 = vunpack.c.l.s4 1934713408
        %v421 = vunpack.c.0.s8 %v420
        %v422 = vperm.slane %v416, %v421
        %v424 = vunpack.c.l.s4 1934713408
        %v425 = vunpack.c.0.s8 %v424
        %v426 = vperm.slane %v418, %v425
        %v427 = vrot.slane %v390, 4
        %v428 = vsel %vm255, %v427, %v378
        %v429 = vrot.slane %v378, 4
        %v430 = vsel %vm255, %v390, %v429
        %v432 = vunpack.c.l.s4 1934713408
        %v433 = vunpack.c.0.s8 %v432
        %v434 = vperm.slane %v428, %v433
        %v436 = vunpack.c.l.s4 1934713408
        %v437 = vunpack.c.0.s8 %v436
        %v438 = vperm.slane %v430, %v437
        %v439 = vrot.slane %v410, 4
        %v440 = vsel %vm255, %v439, %v398
        %v441 = vrot.slane %v398, 4
        %v442 = vsel %vm255, %v410, %v441
        %v444 = vunpack.c.l.s4 1934713408
        %v445 = vunpack.c.0.s8 %v444
        %v446 = vperm.slane %v440, %v445
        %v448 = vunpack.c.l.s4 1934713408
        %v449 = vunpack.c.0.s8 %v448
        %v450 = vperm.slane %v442, %v449
        %v451 = vrot.slane %v414, 4
        %v452 = vsel %vm255, %v451, %v402
        %v453 = vrot.slane %v402, 4
        %v454 = vsel %vm255, %v414, %v453
        %v456 = vunpack.c.l.s4 1934713408
        %v457 = vunpack.c.0.s8 %v456
        %v458 = vperm.slane %v452, %v457
        %v460 = vunpack.c.l.s4 1934713408
        %v461 = vunpack.c.0.s8 %v460
        %v462 = vperm.slane %v454, %v461
        %v463 = vrot.slane %v446, 4
        %v464 = vsel %vm255, %v463, %v422
        %v465 = vrot.slane %v422, 4
        %v466 = vsel %vm255, %v446, %v465
        %v467 = vrot.slane %v450, 4
        %v468 = vsel %vm255, %v467, %v426
        %v469 = vrot.slane %v426, 4
        %v470 = vsel %vm255, %v450, %v469
        %v471 = vrot.slane %v458, 4
        %v472 = vsel %vm255, %v471, %v434
        %v473 = vrot.slane %v434, 4
        %v474 = vsel %vm255, %v458, %v473
        %v475 = vrot.slane %v462, 4
        %v476 = vsel %vm255, %v475, %v438
        %v477 = vrot.slane %v438, 4
        %v478 = vsel %vm255, %v462, %v477
        %v479 = vrot.slane %v187, 4
        %v480 = vsel %vm255, %v479, %v163
        %v481 = vrot.slane %v163, 4
        %v482 = vsel %vm255, %v187, %v481
        %v484 = vunpack.c.l.s4 1983009808
        %v485 = vunpack.c.0.s8 %v484
        %v486 = vperm.slane %v480, %v485
        %v488 = vunpack.c.l.s4 1983009808
        %v489 = vunpack.c.0.s8 %v488
        %v490 = vperm.slane %v482, %v489
        %v491 = vrot.slane %v199, 4
        %v492 = vsel %vm255, %v491, %v175
        %v493 = vrot.slane %v175, 4
        %v494 = vsel %vm255, %v199, %v493
        %v496 = vunpack.c.l.s4 1983009808
        %v497 = vunpack.c.0.s8 %v496
        %v498 = vperm.slane %v492, %v497
        %v500 = vunpack.c.l.s4 1983009808
        %v501 = vunpack.c.0.s8 %v500
        %v502 = vperm.slane %v494, %v501
        %v503 = vrot.slane %v235, 4
        %v504 = vsel %vm255, %v503, %v211
        %v505 = vrot.slane %v211, 4
        %v506 = vsel %vm255, %v235, %v505
        %v508 = vunpack.c.l.s4 1983009808
        %v509 = vunpack.c.0.s8 %v508
        %v510 = vperm.slane %v504, %v509
        %v512 = vunpack.c.l.s4 1983009808
        %v513 = vunpack.c.0.s8 %v512
        %v514 = vperm.slane %v506, %v513
        %v515 = vrot.slane %v247, 4
        %v516 = vsel %vm255, %v515, %v223
        %v517 = vrot.slane %v223, 4
        %v518 = vsel %vm255, %v247, %v517
        %v520 = vunpack.c.l.s4 1983009808
        %v521 = vunpack.c.0.s8 %v520
        %v522 = vperm.slane %v516, %v521
        %v524 = vunpack.c.l.s4 1983009808
        %v525 = vunpack.c.0.s8 %v524
        %v526 = vperm.slane %v518, %v525
        %v527 = vrot.slane %v498, 4
        %v528 = vsel %vm255, %v527, %v486
        %v529 = vrot.slane %v486, 4
        %v530 = vsel %vm255, %v498, %v529
        %v532 = vunpack.c.l.s4 1934713408
        %v533 = vunpack.c.0.s8 %v532
        %v534 = vperm.slane %v528, %v533
        %v536 = vunpack.c.l.s4 1934713408
        %v537 = vunpack.c.0.s8 %v536
        %v538 = vperm.slane %v530, %v537
        %v539 = vrot.slane %v502, 4
        %v540 = vsel %vm255, %v539, %v490
        %v541 = vrot.slane %v490, 4
        %v542 = vsel %vm255, %v502, %v541
        %v544 = vunpack.c.l.s4 1934713408
        %v545 = vunpack.c.0.s8 %v544
        %v546 = vperm.slane %v540, %v545
        %v548 = vunpack.c.l.s4 1934713408
        %v549 = vunpack.c.0.s8 %v548
        %v550 = vperm.slane %v542, %v549
        %v551 = vrot.slane %v522, 4
        %v552 = vsel %vm255, %v551, %v510
        %v553 = vrot.slane %v510, 4
        %v554 = vsel %vm255, %v522, %v553
        %v556 = vunpack.c.l.s4 1934713408
        %v557 = vunpack.c.0.s8 %v556
        %v558 = vperm.slane %v552, %v557
        %v560 = vunpack.c.l.s4 1934713408
        %v561 = vunpack.c.0.s8 %v560
        %v562 = vperm.slane %v554, %v561
        %v563 = vrot.slane %v526, 4
        %v564 = vsel %vm255, %v563, %v514
        %v565 = vrot.slane %v514, 4
        %v566 = vsel %vm255, %v526, %v565
        %v568 = vunpack.c.l.s4 1934713408
        %v569 = vunpack.c.0.s8 %v568
        %v570 = vperm.slane %v564, %v569
        %v572 = vunpack.c.l.s4 1934713408
        %v573 = vunpack.c.0.s8 %v572
        %v574 = vperm.slane %v566, %v573
        %v575 = vrot.slane %v558, 4
        %v576 = vsel %vm255, %v575, %v534
        %v577 = vrot.slane %v534, 4
        %v578 = vsel %vm255, %v558, %v577
        %v579 = vrot.slane %v562, 4
        %v580 = vsel %vm255, %v579, %v538
        %v581 = vrot.slane %v538, 4
        %v582 = vsel %vm255, %v562, %v581
        %v583 = vrot.slane %v570, 4
        %v584 = vsel %vm255, %v583, %v546
        %v585 = vrot.slane %v546, 4
        %v586 = vsel %vm255, %v570, %v585
        %v587 = vrot.slane %v574, 4
        %v588 = vsel %vm255, %v587, %v550
        %v589 = vrot.slane %v550, 4
        %v590 = vsel %vm255, %v574, %v589
        %v591 = vrot.slane %v189, 4
        %v592 = vsel %vm255, %v591, %v165
        %v593 = vrot.slane %v165, 4
        %v594 = vsel %vm255, %v189, %v593
        %v596 = vunpack.c.l.s4 1983009808
        %v597 = vunpack.c.0.s8 %v596
        %v598 = vperm.slane %v592, %v597
        %v600 = vunpack.c.l.s4 1983009808
        %v601 = vunpack.c.0.s8 %v600
        %v602 = vperm.slane %v594, %v601
        %v603 = vrot.slane %v201, 4
        %v604 = vsel %vm255, %v603, %v177
        %v605 = vrot.slane %v177, 4
        %v606 = vsel %vm255, %v201, %v605
        %v608 = vunpack.c.l.s4 1983009808
        %v609 = vunpack.c.0.s8 %v608
        %v610 = vperm.slane %v604, %v609
        %v612 = vunpack.c.l.s4 1983009808
        %v613 = vunpack.c.0.s8 %v612
        %v614 = vperm.slane %v606, %v613
        %v615 = vrot.slane %v237, 4
        %v616 = vsel %vm255, %v615, %v213
        %v617 = vrot.slane %v213, 4
        %v618 = vsel %vm255, %v237, %v617
        %v620 = vunpack.c.l.s4 1983009808
        %v621 = vunpack.c.0.s8 %v620
        %v622 = vperm.slane %v616, %v621
        %v624 = vunpack.c.l.s4 1983009808
        %v625 = vunpack.c.0.s8 %v624
        %v626 = vperm.slane %v618, %v625
        %v627 = vrot.slane %v249, 4
        %v628 = vsel %vm255, %v627, %v225
        %v629 = vrot.slane %v225, 4
        %v630 = vsel %vm255, %v249, %v629
        %v632 = vunpack.c.l.s4 1983009808
        %v633 = vunpack.c.0.s8 %v632
        %v634 = vperm.slane %v628, %v633
        %v636 = vunpack.c.l.s4 1983009808
        %v637 = vunpack.c.0.s8 %v636
        %v638 = vperm.slane %v630, %v637
        %v639 = vrot.slane %v610, 4
        %v640 = vsel %vm255, %v639, %v598
        %v641 = vrot.slane %v598, 4
        %v642 = vsel %vm255, %v610, %v641
        %v644 = vunpack.c.l.s4 1934713408
        %v645 = vunpack.c.0.s8 %v644
        %v646 = vperm.slane %v640, %v645
        %v648 = vunpack.c.l.s4 1934713408
        %v649 = vunpack.c.0.s8 %v648
        %v650 = vperm.slane %v642, %v649
        %v651 = vrot.slane %v614, 4
        %v652 = vsel %vm255, %v651, %v602
        %v653 = vrot.slane %v602, 4
        %v654 = vsel %vm255, %v614, %v653
        %v656 = vunpack.c.l.s4 1934713408
        %v657 = vunpack.c.0.s8 %v656
        %v658 = vperm.slane %v652, %v657
        %v660 = vunpack.c.l.s4 1934713408
        %v661 = vunpack.c.0.s8 %v660
        %v662 = vperm.slane %v654, %v661
        %v663 = vrot.slane %v634, 4
        %v664 = vsel %vm255, %v663, %v622
        %v665 = vrot.slane %v622, 4
        %v666 = vsel %vm255, %v634, %v665
        %v668 = vunpack.c.l.s4 1934713408
        %v669 = vunpack.c.0.s8 %v668
        %v670 = vperm.slane %v664, %v669
        %v672 = vunpack.c.l.s4 1934713408
        %v673 = vunpack.c.0.s8 %v672
        %v674 = vperm.slane %v666, %v673
        %v675 = vrot.slane %v638, 4
        %v676 = vsel %vm255, %v675, %v626
        %v677 = vrot.slane %v626, 4
        %v678 = vsel %vm255, %v638, %v677
        %v680 = vunpack.c.l.s4 1934713408
        %v681 = vunpack.c.0.s8 %v680
        %v682 = vperm.slane %v676, %v681
        %v684 = vunpack.c.l.s4 1934713408
        %v685 = vunpack.c.0.s8 %v684
        %v686 = vperm.slane %v678, %v685
        %v687 = vrot.slane %v670, 4
        %v688 = vsel %vm255, %v687, %v646
        %v689 = vrot.slane %v646, 4
        %v690 = vsel %vm255, %v670, %v689
        %v691 = vrot.slane %v674, 4
        %v692 = vsel %vm255, %v691, %v650
        %v693 = vrot.slane %v650, 4
        %v694 = vsel %vm255, %v674, %v693
        %v695 = vrot.slane %v682, 4
        %v696 = vsel %vm255, %v695, %v658
        %v697 = vrot.slane %v658, 4
        %v698 = vsel %vm255, %v682, %v697
        %v699 = vrot.slane %v686, 4
        %v700 = vsel %vm255, %v699, %v662
        %v701 = vrot.slane %v662, 4
        %v702 = vsel %vm255, %v686, %v701
        %735 = vset.pattern.permute.xlu0 0
        %736 = vperm.xlu0 %735, %v352
        %v737 = vpop.permute.xlu0 %736
        %738 = vset.pattern.permute.xlu0 0
        %739 = vperm.xlu0 %738, %v354
        %v740 = vpop.permute.xlu0 %739
        %741 = vset.pattern.permute.xlu0 0
        %742 = vperm.xlu0 %741, %v356
        %v743 = vpop.permute.xlu0 %742
        %744 = vset.pattern.permute.xlu0 0
        %745 = vperm.xlu0 %744, %v358
        %v746 = vpop.permute.xlu0 %745
        %747 = vset.pattern.permute.xlu0 0
        %748 = vperm.xlu0 %747, %v360
        %v749 = vpop.permute.xlu0 %748
        %750 = vset.pattern.permute.xlu0 0
        %751 = vperm.xlu0 %750, %v362
        %v752 = vpop.permute.xlu0 %751
        %753 = vset.pattern.permute.xlu0 0
        %754 = vperm.xlu0 %753, %v364
        %v755 = vpop.permute.xlu0 %754
        %756 = vset.pattern.permute.xlu0 0
        %757 = vperm.xlu0 %756, %v366
        %v758 = vpop.permute.xlu0 %757
        %759 = vset.pattern.permute.xlu0 0
        %760 = vperm.xlu0 %759, %v464
        %v761 = vpop.permute.xlu0 %760
        %762 = vset.pattern.permute.xlu0 0
        %763 = vperm.xlu0 %762, %v466
        %v764 = vpop.permute.xlu0 %763
        %765 = vset.pattern.permute.xlu0 0
        %766 = vperm.xlu0 %765, %v468
        %v767 = vpop.permute.xlu0 %766
        %768 = vset.pattern.permute.xlu0 0
        %769 = vperm.xlu0 %768, %v470
        %v770 = vpop.permute.xlu0 %769
        %771 = vset.pattern.permute.xlu0 0
        %772 = vperm.xlu0 %771, %v472
        %v773 = vpop.permute.xlu0 %772
        %774 = vset.pattern.permute.xlu0 0
        %775 = vperm.xlu0 %774, %v474
        %v776 = vpop.permute.xlu0 %775
        %777 = vset.pattern.permute.xlu0 0
        %778 = vperm.xlu0 %777, %v476
        %v779 = vpop.permute.xlu0 %778
        %780 = vset.pattern.permute.xlu0 0
        %781 = vperm.xlu0 %780, %v478
        %v782 = vpop.permute.xlu0 %781
        %783 = vset.pattern.permute.xlu0 0
        %784 = vperm.xlu0 %783, %v576
        %v785 = vpop.permute.xlu0 %784
        %786 = vset.pattern.permute.xlu0 0
        %787 = vperm.xlu0 %786, %v578
        %v788 = vpop.permute.xlu0 %787
        %789 = vset.pattern.permute.xlu0 0
        %790 = vperm.xlu0 %789, %v580
        %v791 = vpop.permute.xlu0 %790
        %792 = vset.pattern.permute.xlu0 0
        %793 = vperm.xlu0 %792, %v582
        %v794 = vpop.permute.xlu0 %793
        %795 = vset.pattern.permute.xlu0 0
        %796 = vperm.xlu0 %795, %v584
        %v797 = vpop.permute.xlu0 %796
        %798 = vset.pattern.permute.xlu0 0
        %799 = vperm.xlu0 %798, %v586
        %v800 = vpop.permute.xlu0 %799
        %801 = vset.pattern.permute.xlu0 0
        %802 = vperm.xlu0 %801, %v588
        %v803 = vpop.permute.xlu0 %802
        %804 = vset.pattern.permute.xlu0 0
        %805 = vperm.xlu0 %804, %v590
        %v806 = vpop.permute.xlu0 %805
        %807 = vset.pattern.permute.xlu0 0
        %808 = vperm.xlu0 %807, %v688
        %v809 = vpop.permute.xlu0 %808
        %810 = vset.pattern.permute.xlu0 0
        %811 = vperm.xlu0 %810, %v690
        %v812 = vpop.permute.xlu0 %811
        %813 = vset.pattern.permute.xlu0 0
        %814 = vperm.xlu0 %813, %v692
        %v815 = vpop.permute.xlu0 %814
        %816 = vset.pattern.permute.xlu0 0
        %817 = vperm.xlu0 %816, %v694
        %v818 = vpop.permute.xlu0 %817
        %819 = vset.pattern.permute.xlu0 0
        %820 = vperm.xlu0 %819, %v696
        %v821 = vpop.permute.xlu0 %820
        %822 = vset.pattern.permute.xlu0 0
        %823 = vperm.xlu0 %822, %v698
        %v824 = vpop.permute.xlu0 %823
        %825 = vset.pattern.permute.xlu0 0
        %826 = vperm.xlu0 %825, %v700
        %v827 = vpop.permute.xlu0 %826
        %828 = vset.pattern.permute.xlu0 0
        %829 = vperm.xlu0 %828, %v702
        %v830 = vpop.permute.xlu0 %829
        %v831 = vlaneseq
        %v832 = vand.u32 %v831, 127
        %v833 = vperm.slane %v737, %v832
        %v834 = vperm.slane %v740, %v832
        %v835 = vperm.slane %v743, %v832
        %v836 = vperm.slane %v746, %v832
        %v837 = vperm.slane %v749, %v832
        %v838 = vperm.slane %v752, %v832
        %v839 = vperm.slane %v755, %v832
        %v840 = vperm.slane %v758, %v832
        %v841 = vperm.slane %v761, %v832
        %v842 = vperm.slane %v764, %v832
        %v843 = vperm.slane %v767, %v832
        %v844 = vperm.slane %v770, %v832
        %v845 = vperm.slane %v773, %v832
        %v846 = vperm.slane %v776, %v832
        %v847 = vperm.slane %v779, %v832
        %v848 = vperm.slane %v782, %v832
        %v849 = vperm.slane %v785, %v832
        %v850 = vperm.slane %v788, %v832
        %v851 = vperm.slane %v791, %v832
        %v852 = vperm.slane %v794, %v832
        %v853 = vperm.slane %v797, %v832
        %v854 = vperm.slane %v800, %v832
        %v855 = vperm.slane %v803, %v832
        %v856 = vperm.slane %v806, %v832
        %v857 = vperm.slane %v809, %v832
        %v858 = vperm.slane %v812, %v832
        %v859 = vperm.slane %v815, %v832
        %v860 = vperm.slane %v818, %v832
        %v861 = vperm.slane %v821, %v832
        %v862 = vperm.slane %v824, %v832
        %v863 = vperm.slane %v827, %v832
        %v864 = vperm.slane %v830, %v832
        %vm865 = vcmask 1041409
        %v866 = vsel %vm865, %v834, %v833
        %vm867 = vcmask 1042434
        %v868 = vsel %vm867, %v835, %v866
        %vm869 = vcmask 1043459
        %v870 = vsel %vm869, %v836, %v868
        %vm871 = vcmask 1044484
        %v872 = vsel %vm871, %v837, %v870
        %vm873 = vcmask 1045509
        %v874 = vsel %vm873, %v838, %v872
        %vm875 = vcmask 1046534
        %v876 = vsel %vm875, %v839, %v874
        %vm877 = vcmask 1047559
        %v878 = vsel %vm877, %v840, %v876
        %v879 = vsel %vm865, %v842, %v841
        %v880 = vsel %vm867, %v843, %v879
        %v881 = vsel %vm869, %v844, %v880
        %v882 = vsel %vm871, %v845, %v881
        %v883 = vsel %vm873, %v846, %v882
        %v884 = vsel %vm875, %v847, %v883
        %v885 = vsel %vm877, %v848, %v884
        %v886 = vsel %vm865, %v850, %v849
        %v887 = vsel %vm867, %v851, %v886
        %v888 = vsel %vm869, %v852, %v887
        %v889 = vsel %vm871, %v853, %v888
        %v890 = vsel %vm873, %v854, %v889
        %v891 = vsel %vm875, %v855, %v890
        %v892 = vsel %vm877, %v856, %v891
        %v893 = vsel %vm865, %v858, %v857
        %v894 = vsel %vm867, %v859, %v893
        %v895 = vsel %vm869, %v860, %v894
        %v896 = vsel %vm871, %v861, %v895
        %v897 = vsel %vm873, %v862, %v896
        %v898 = vsel %vm875, %v863, %v897
        %v899 = vsel %vm877, %v864, %v898
        %vm904 = vcmask 64512
        %905 = vst.msk [vmem:[%s155] sm:$0xff] %vm904, %v878
        %906 = vst.msk [vmem:[%s155 + $0x20] sm:$0xff] %vm904, %v885
        %907 = vst.msk [vmem:[%s155 + $0x40] sm:$0xff] %vm904, %v892
        %908 = vst.msk [vmem:[%s155 + $0x60] sm:$0xff] %vm904, %v899
        %909 = vset.pattern.permute.xlu0 1
        %910 = vperm.xlu0 %909, %v352
        %v911 = vpop.permute.xlu0 %910
        %912 = vset.pattern.permute.xlu0 1
        %913 = vperm.xlu0 %912, %v354
        %v914 = vpop.permute.xlu0 %913
        %915 = vset.pattern.permute.xlu0 1
        %916 = vperm.xlu0 %915, %v356
        %v917 = vpop.permute.xlu0 %916
        %918 = vset.pattern.permute.xlu0 1
        %919 = vperm.xlu0 %918, %v358
        %v920 = vpop.permute.xlu0 %919
        %921 = vset.pattern.permute.xlu0 1
        %922 = vperm.xlu0 %921, %v360
        %v923 = vpop.permute.xlu0 %922
        %924 = vset.pattern.permute.xlu0 1
        %925 = vperm.xlu0 %924, %v362
        %v926 = vpop.permute.xlu0 %925
        %927 = vset.pattern.permute.xlu0 1
        %928 = vperm.xlu0 %927, %v364
        %v929 = vpop.permute.xlu0 %928
        %930 = vset.pattern.permute.xlu0 1
        %931 = vperm.xlu0 %930, %v366
        %v932 = vpop.permute.xlu0 %931
        %933 = vset.pattern.permute.xlu0 1
        %934 = vperm.xlu0 %933, %v464
        %v935 = vpop.permute.xlu0 %934
        %936 = vset.pattern.permute.xlu0 1
        %937 = vperm.xlu0 %936, %v466
        %v938 = vpop.permute.xlu0 %937
        %939 = vset.pattern.permute.xlu0 1
        %940 = vperm.xlu0 %939, %v468
        %v941 = vpop.permute.xlu0 %940
        %942 = vset.pattern.permute.xlu0 1
        %943 = vperm.xlu0 %942, %v470
        %v944 = vpop.permute.xlu0 %943
        %945 = vset.pattern.permute.xlu0 1
        %946 = vperm.xlu0 %945, %v472
        %v947 = vpop.permute.xlu0 %946
        %948 = vset.pattern.permute.xlu0 1
        %949 = vperm.xlu0 %948, %v474
        %v950 = vpop.permute.xlu0 %949
        %951 = vset.pattern.permute.xlu0 1
        %952 = vperm.xlu0 %951, %v476
        %v953 = vpop.permute.xlu0 %952
        %954 = vset.pattern.permute.xlu0 1
        %955 = vperm.xlu0 %954, %v478
        %v956 = vpop.permute.xlu0 %955
        %957 = vset.pattern.permute.xlu0 1
        %958 = vperm.xlu0 %957, %v576
        %v959 = vpop.permute.xlu0 %958
        %960 = vset.pattern.permute.xlu0 1
        %961 = vperm.xlu0 %960, %v578
        %v962 = vpop.permute.xlu0 %961
        %963 = vset.pattern.permute.xlu0 1
        %964 = vperm.xlu0 %963, %v580
        %v965 = vpop.permute.xlu0 %964
        %966 = vset.pattern.permute.xlu0 1
        %967 = vperm.xlu0 %966, %v582
        %v968 = vpop.permute.xlu0 %967
        %969 = vset.pattern.permute.xlu0 1
        %970 = vperm.xlu0 %969, %v584
        %v971 = vpop.permute.xlu0 %970
        %972 = vset.pattern.permute.xlu0 1
        %973 = vperm.xlu0 %972, %v586
        %v974 = vpop.permute.xlu0 %973
        %975 = vset.pattern.permute.xlu0 1
        %976 = vperm.xlu0 %975, %v588
        %v977 = vpop.permute.xlu0 %976
        %978 = vset.pattern.permute.xlu0 1
        %979 = vperm.xlu0 %978, %v590
        %v980 = vpop.permute.xlu0 %979
        %981 = vset.pattern.permute.xlu0 1
        %982 = vperm.xlu0 %981, %v688
        %v983 = vpop.permute.xlu0 %982
        %984 = vset.pattern.permute.xlu0 1
        %985 = vperm.xlu0 %984, %v690
        %v986 = vpop.permute.xlu0 %985
        %987 = vset.pattern.permute.xlu0 1
        %988 = vperm.xlu0 %987, %v692
        %v989 = vpop.permute.xlu0 %988
        %990 = vset.pattern.permute.xlu0 1
        %991 = vperm.xlu0 %990, %v694
        %v992 = vpop.permute.xlu0 %991
        %993 = vset.pattern.permute.xlu0 1
        %994 = vperm.xlu0 %993, %v696
        %v995 = vpop.permute.xlu0 %994
        %996 = vset.pattern.permute.xlu0 1
        %997 = vperm.xlu0 %996, %v698
        %v998 = vpop.permute.xlu0 %997
        %999 = vset.pattern.permute.xlu0 1
        %1000 = vperm.xlu0 %999, %v700
        %v1001 = vpop.permute.xlu0 %1000
        %1002 = vset.pattern.permute.xlu0 1
        %1003 = vperm.xlu0 %1002, %v702
        %v1004 = vpop.permute.xlu0 %1003
        %v1005 = vperm.slane %v911, %v832
        %v1006 = vperm.slane %v914, %v832
        %v1007 = vperm.slane %v917, %v832
        %v1008 = vperm.slane %v920, %v832
        %v1009 = vperm.slane %v923, %v832
        %v1010 = vperm.slane %v926, %v832
        %v1011 = vperm.slane %v929, %v832
        %v1012 = vperm.slane %v932, %v832
        %v1013 = vperm.slane %v935, %v832
        %v1014 = vperm.slane %v938, %v832
        %v1015 = vperm.slane %v941, %v832
        %v1016 = vperm.slane %v944, %v832
        %v1017 = vperm.slane %v947, %v832
        %v1018 = vperm.slane %v950, %v832
        %v1019 = vperm.slane %v953, %v832
        %v1020 = vperm.slane %v956, %v832
        %v1021 = vperm.slane %v959, %v832
        %v1022 = vperm.slane %v962, %v832
        %v1023 = vperm.slane %v965, %v832
        %v1024 = vperm.slane %v968, %v832
        %v1025 = vperm.slane %v971, %v832
        %v1026 = vperm.slane %v974, %v832
        %v1027 = vperm.slane %v977, %v832
        %v1028 = vperm.slane %v980, %v832
        %v1029 = vperm.slane %v983, %v832
        %v1030 = vperm.slane %v986, %v832
        %v1031 = vperm.slane %v989, %v832
        %v1032 = vperm.slane %v992, %v832
        %v1033 = vperm.slane %v995, %v832
        %v1034 = vperm.slane %v998, %v832
        %v1035 = vperm.slane %v1001, %v832
        %v1036 = vperm.slane %v1004, %v832
        %v1037 = vsel %vm865, %v1006, %v1005
        %v1038 = vsel %vm867, %v1007, %v1037
        %v1039 = vsel %vm869, %v1008, %v1038
        %v1040 = vsel %vm871, %v1009, %v1039
        %v1041 = vsel %vm873, %v1010, %v1040
        %v1042 = vsel %vm875, %v1011, %v1041
        %v1043 = vsel %vm877, %v1012, %v1042
        %v1044 = vsel %vm865, %v1014, %v1013
        %v1045 = vsel %vm867, %v1015, %v1044
        %v1046 = vsel %vm869, %v1016, %v1045
        %v1047 = vsel %vm871, %v1017, %v1046
        %v1048 = vsel %vm873, %v1018, %v1047
        %v1049 = vsel %vm875, %v1019, %v1048
        %v1050 = vsel %vm877, %v1020, %v1049
        %v1051 = vsel %vm865, %v1022, %v1021
        %v1052 = vsel %vm867, %v1023, %v1051
        %v1053 = vsel %vm869, %v1024, %v1052
        %v1054 = vsel %vm871, %v1025, %v1053
        %v1055 = vsel %vm873, %v1026, %v1054
        %v1056 = vsel %vm875, %v1027, %v1055
        %v1057 = vsel %vm877, %v1028, %v1056
        %v1058 = vsel %vm865, %v1030, %v1029
        %v1059 = vsel %vm867, %v1031, %v1058
        %v1060 = vsel %vm869, %v1032, %v1059
        %v1061 = vsel %vm871, %v1033, %v1060
        %v1062 = vsel %vm873, %v1034, %v1061
        %v1063 = vsel %vm875, %v1035, %v1062
        %v1064 = vsel %vm877, %v1036, %v1063
        %s1069 = scalar_lea.vmem %s155, 8 [#allocation5]
        %1070 = vst.msk [vmem:[%s1069] sm:$0xff] %vm904, %v1043
        %1071 = vst.msk [vmem:[%s1069 + $0x20] sm:$0xff] %vm904, %v1050
        %1072 = vst.msk [vmem:[%s1069 + $0x40] sm:$0xff] %vm904, %v1057
        %1073 = vst.msk [vmem:[%s1069 + $0x60] sm:$0xff] %vm904, %v1064
        %s1074 = scalar_lea.vmem %s136, 1 [#allocation2]
        %v1075 = vld [vmem:[%s1074] ss:$2 sm:$0xff]
        %s1076 = scalar_lea.vmem %s136, 17 [#allocation2]
        %v1077 = vld [vmem:[%s1076] ss:$2 sm:$0xff]
        %s1078 = scalar_lea.vmem %s136, 33 [#allocation2]
        %v1079 = vld [vmem:[%s1078] ss:$2 sm:$0xff]
        %s1080 = scalar_lea.vmem %s136, 49 [#allocation2]
        %v1081 = vld [vmem:[%s1080] ss:$2 sm:$0xff]
        %1086 = vrot.lane.b32.xlu0 %v1075, 126
        %v1087 = vpop.permute.xlu0 %1086
        %1088 = vrot.lane.b32.xlu0 %v1077, 126
        %v1089 = vpop.permute.xlu0 %1088
        %1090 = vrot.lane.b32.xlu0 %v1079, 126
        %v1091 = vpop.permute.xlu0 %1090
        %1092 = vrot.lane.b32.xlu0 %v1081, 126
        %v1093 = vpop.permute.xlu0 %1092
        %1098 = vrot.lane.b32.xlu0 %v1075, 124
        %v1099 = vpop.permute.xlu0 %1098
        %1100 = vrot.lane.b32.xlu0 %v1077, 124
        %v1101 = vpop.permute.xlu0 %1100
        %1102 = vrot.lane.b32.xlu0 %v1079, 124
        %v1103 = vpop.permute.xlu0 %1102
        %1104 = vrot.lane.b32.xlu0 %v1081, 124
        %v1105 = vpop.permute.xlu0 %1104
        %1110 = vrot.lane.b32.xlu0 %v1075, 122
        %v1111 = vpop.permute.xlu0 %1110
        %1112 = vrot.lane.b32.xlu0 %v1077, 122
        %v1113 = vpop.permute.xlu0 %1112
        %1114 = vrot.lane.b32.xlu0 %v1079, 122
        %v1115 = vpop.permute.xlu0 %1114
        %1116 = vrot.lane.b32.xlu0 %v1081, 122
        %v1117 = vpop.permute.xlu0 %1116
        %1122 = vrot.lane.b32.xlu0 %v1075, 120
        %v1123 = vpop.permute.xlu0 %1122
        %1124 = vrot.lane.b32.xlu0 %v1077, 120
        %v1125 = vpop.permute.xlu0 %1124
        %1126 = vrot.lane.b32.xlu0 %v1079, 120
        %v1127 = vpop.permute.xlu0 %1126
        %1128 = vrot.lane.b32.xlu0 %v1081, 120
        %v1129 = vpop.permute.xlu0 %1128
        %1134 = vrot.lane.b32.xlu0 %v1075, 118
        %v1135 = vpop.permute.xlu0 %1134
        %1136 = vrot.lane.b32.xlu0 %v1077, 118
        %v1137 = vpop.permute.xlu0 %1136
        %1138 = vrot.lane.b32.xlu0 %v1079, 118
        %v1139 = vpop.permute.xlu0 %1138
        %1140 = vrot.lane.b32.xlu0 %v1081, 118
        %v1141 = vpop.permute.xlu0 %1140
        %1146 = vrot.lane.b32.xlu0 %v1075, 116
        %v1147 = vpop.permute.xlu0 %1146
        %1148 = vrot.lane.b32.xlu0 %v1077, 116
        %v1149 = vpop.permute.xlu0 %1148
        %1150 = vrot.lane.b32.xlu0 %v1079, 116
        %v1151 = vpop.permute.xlu0 %1150
        %1152 = vrot.lane.b32.xlu0 %v1081, 116
        %v1153 = vpop.permute.xlu0 %1152
        %1158 = vrot.lane.b32.xlu0 %v1075, 114
        %v1159 = vpop.permute.xlu0 %1158
        %1160 = vrot.lane.b32.xlu0 %v1077, 114
        %v1161 = vpop.permute.xlu0 %1160
        %1162 = vrot.lane.b32.xlu0 %v1079, 114
        %v1163 = vpop.permute.xlu0 %1162
        %1164 = vrot.lane.b32.xlu0 %v1081, 114
        %v1165 = vpop.permute.xlu0 %1164
        %v1170 = vrot.slane %v1099, 4
        %v1171 = vsel %vm255, %v1170, %v1075
        %v1172 = vrot.slane %v1075, 4
        %v1173 = vsel %vm255, %v1099, %v1172
        %v1175 = vunpack.c.l.s4 1983009808
        %v1176 = vunpack.c.0.s8 %v1175
        %v1177 = vperm.slane %v1171, %v1176
        %v1179 = vunpack.c.l.s4 1983009808
        %v1180 = vunpack.c.0.s8 %v1179
        %v1181 = vperm.slane %v1173, %v1180
        %v1182 = vrot.slane %v1111, 4
        %v1183 = vsel %vm255, %v1182, %v1087
        %v1184 = vrot.slane %v1087, 4
        %v1185 = vsel %vm255, %v1111, %v1184
        %v1187 = vunpack.c.l.s4 1983009808
        %v1188 = vunpack.c.0.s8 %v1187
        %v1189 = vperm.slane %v1183, %v1188
        %v1191 = vunpack.c.l.s4 1983009808
        %v1192 = vunpack.c.0.s8 %v1191
        %v1193 = vperm.slane %v1185, %v1192
        %v1194 = vrot.slane %v1147, 4
        %v1195 = vsel %vm255, %v1194, %v1123
        %v1196 = vrot.slane %v1123, 4
        %v1197 = vsel %vm255, %v1147, %v1196
        %v1199 = vunpack.c.l.s4 1983009808
        %v1200 = vunpack.c.0.s8 %v1199
        %v1201 = vperm.slane %v1195, %v1200
        %v1203 = vunpack.c.l.s4 1983009808
        %v1204 = vunpack.c.0.s8 %v1203
        %v1205 = vperm.slane %v1197, %v1204
        %v1206 = vrot.slane %v1159, 4
        %v1207 = vsel %vm255, %v1206, %v1135
        %v1208 = vrot.slane %v1135, 4
        %v1209 = vsel %vm255, %v1159, %v1208
        %v1211 = vunpack.c.l.s4 1983009808
        %v1212 = vunpack.c.0.s8 %v1211
        %v1213 = vperm.slane %v1207, %v1212
        %v1215 = vunpack.c.l.s4 1983009808
        %v1216 = vunpack.c.0.s8 %v1215
        %v1217 = vperm.slane %v1209, %v1216
        %v1218 = vrot.slane %v1189, 4
        %v1219 = vsel %vm255, %v1218, %v1177
        %v1220 = vrot.slane %v1177, 4
        %v1221 = vsel %vm255, %v1189, %v1220
        %v1223 = vunpack.c.l.s4 1934713408
        %v1224 = vunpack.c.0.s8 %v1223
        %v1225 = vperm.slane %v1219, %v1224
        %v1227 = vunpack.c.l.s4 1934713408
        %v1228 = vunpack.c.0.s8 %v1227
        %v1229 = vperm.slane %v1221, %v1228
        %v1230 = vrot.slane %v1193, 4
        %v1231 = vsel %vm255, %v1230, %v1181
        %v1232 = vrot.slane %v1181, 4
        %v1233 = vsel %vm255, %v1193, %v1232
        %v1235 = vunpack.c.l.s4 1934713408
        %v1236 = vunpack.c.0.s8 %v1235
        %v1237 = vperm.slane %v1231, %v1236
        %v1239 = vunpack.c.l.s4 1934713408
        %v1240 = vunpack.c.0.s8 %v1239
        %v1241 = vperm.slane %v1233, %v1240
        %v1242 = vrot.slane %v1213, 4
        %v1243 = vsel %vm255, %v1242, %v1201
        %v1244 = vrot.slane %v1201, 4
        %v1245 = vsel %vm255, %v1213, %v1244
        %v1247 = vunpack.c.l.s4 1934713408
        %v1248 = vunpack.c.0.s8 %v1247
        %v1249 = vperm.slane %v1243, %v1248
        %v1251 = vunpack.c.l.s4 1934713408
        %v1252 = vunpack.c.0.s8 %v1251
        %v1253 = vperm.slane %v1245, %v1252
        %v1254 = vrot.slane %v1217, 4
        %v1255 = vsel %vm255, %v1254, %v1205
        %v1256 = vrot.slane %v1205, 4
        %v1257 = vsel %vm255, %v1217, %v1256
        %v1259 = vunpack.c.l.s4 1934713408
        %v1260 = vunpack.c.0.s8 %v1259
        %v1261 = vperm.slane %v1255, %v1260
        %v1263 = vunpack.c.l.s4 1934713408
        %v1264 = vunpack.c.0.s8 %v1263
        %v1265 = vperm.slane %v1257, %v1264
        %v1266 = vrot.slane %v1249, 4
        %v1267 = vsel %vm255, %v1266, %v1225
        %v1268 = vrot.slane %v1225, 4
        %v1269 = vsel %vm255, %v1249, %v1268
        %v1270 = vrot.slane %v1253, 4
        %v1271 = vsel %vm255, %v1270, %v1229
        %v1272 = vrot.slane %v1229, 4
        %v1273 = vsel %vm255, %v1253, %v1272
        %v1274 = vrot.slane %v1261, 4
        %v1275 = vsel %vm255, %v1274, %v1237
        %v1276 = vrot.slane %v1237, 4
        %v1277 = vsel %vm255, %v1261, %v1276
        %v1278 = vrot.slane %v1265, 4
        %v1279 = vsel %vm255, %v1278, %v1241
        %v1280 = vrot.slane %v1241, 4
        %v1281 = vsel %vm255, %v1265, %v1280
        %v1282 = vrot.slane %v1101, 4
        %v1283 = vsel %vm255, %v1282, %v1077
        %v1284 = vrot.slane %v1077, 4
        %v1285 = vsel %vm255, %v1101, %v1284
        %v1287 = vunpack.c.l.s4 1983009808
        %v1288 = vunpack.c.0.s8 %v1287
        %v1289 = vperm.slane %v1283, %v1288
        %v1291 = vunpack.c.l.s4 1983009808
        %v1292 = vunpack.c.0.s8 %v1291
        %v1293 = vperm.slane %v1285, %v1292
        %v1294 = vrot.slane %v1113, 4
        %v1295 = vsel %vm255, %v1294, %v1089
        %v1296 = vrot.slane %v1089, 4
        %v1297 = vsel %vm255, %v1113, %v1296
        %v1299 = vunpack.c.l.s4 1983009808
        %v1300 = vunpack.c.0.s8 %v1299
        %v1301 = vperm.slane %v1295, %v1300
        %v1303 = vunpack.c.l.s4 1983009808
        %v1304 = vunpack.c.0.s8 %v1303
        %v1305 = vperm.slane %v1297, %v1304
        %v1306 = vrot.slane %v1149, 4
        %v1307 = vsel %vm255, %v1306, %v1125
        %v1308 = vrot.slane %v1125, 4
        %v1309 = vsel %vm255, %v1149, %v1308
        %v1311 = vunpack.c.l.s4 1983009808
        %v1312 = vunpack.c.0.s8 %v1311
        %v1313 = vperm.slane %v1307, %v1312
        %v1315 = vunpack.c.l.s4 1983009808
        %v1316 = vunpack.c.0.s8 %v1315
        %v1317 = vperm.slane %v1309, %v1316
        %v1318 = vrot.slane %v1161, 4
        %v1319 = vsel %vm255, %v1318, %v1137
        %v1320 = vrot.slane %v1137, 4
        %v1321 = vsel %vm255, %v1161, %v1320
        %v1323 = vunpack.c.l.s4 1983009808
        %v1324 = vunpack.c.0.s8 %v1323
        %v1325 = vperm.slane %v1319, %v1324
        %v1327 = vunpack.c.l.s4 1983009808
        %v1328 = vunpack.c.0.s8 %v1327
        %v1329 = vperm.slane %v1321, %v1328
        %v1330 = vrot.slane %v1301, 4
        %v1331 = vsel %vm255, %v1330, %v1289
        %v1332 = vrot.slane %v1289, 4
        %v1333 = vsel %vm255, %v1301, %v1332
        %v1335 = vunpack.c.l.s4 1934713408
        %v1336 = vunpack.c.0.s8 %v1335
        %v1337 = vperm.slane %v1331, %v1336
        %v1339 = vunpack.c.l.s4 1934713408
        %v1340 = vunpack.c.0.s8 %v1339
        %v1341 = vperm.slane %v1333, %v1340
        %v1342 = vrot.slane %v1305, 4
        %v1343 = vsel %vm255, %v1342, %v1293
        %v1344 = vrot.slane %v1293, 4
        %v1345 = vsel %vm255, %v1305, %v1344
        %v1347 = vunpack.c.l.s4 1934713408
        %v1348 = vunpack.c.0.s8 %v1347
        %v1349 = vperm.slane %v1343, %v1348
        %v1351 = vunpack.c.l.s4 1934713408
        %v1352 = vunpack.c.0.s8 %v1351
        %v1353 = vperm.slane %v1345, %v1352
        %v1354 = vrot.slane %v1325, 4
        %v1355 = vsel %vm255, %v1354, %v1313
        %v1356 = vrot.slane %v1313, 4
        %v1357 = vsel %vm255, %v1325, %v1356
        %v1359 = vunpack.c.l.s4 1934713408
        %v1360 = vunpack.c.0.s8 %v1359
        %v1361 = vperm.slane %v1355, %v1360
        %v1363 = vunpack.c.l.s4 1934713408
        %v1364 = vunpack.c.0.s8 %v1363
        %v1365 = vperm.slane %v1357, %v1364
        %v1366 = vrot.slane %v1329, 4
        %v1367 = vsel %vm255, %v1366, %v1317
        %v1368 = vrot.slane %v1317, 4
        %v1369 = vsel %vm255, %v1329, %v1368
        %v1371 = vunpack.c.l.s4 1934713408
        %v1372 = vunpack.c.0.s8 %v1371
        %v1373 = vperm.slane %v1367, %v1372
        %v1375 = vunpack.c.l.s4 1934713408
        %v1376 = vunpack.c.0.s8 %v1375
        %v1377 = vperm.slane %v1369, %v1376
        %v1378 = vrot.slane %v1361, 4
        %v1379 = vsel %vm255, %v1378, %v1337
        %v1380 = vrot.slane %v1337, 4
        %v1381 = vsel %vm255, %v1361, %v1380
        %v1382 = vrot.slane %v1365, 4
        %v1383 = vsel %vm255, %v1382, %v1341
        %v1384 = vrot.slane %v1341, 4
        %v1385 = vsel %vm255, %v1365, %v1384
        %v1386 = vrot.slane %v1373, 4
        %v1387 = vsel %vm255, %v1386, %v1349
        %v1388 = vrot.slane %v1349, 4
        %v1389 = vsel %vm255, %v1373, %v1388
        %v1390 = vrot.slane %v1377, 4
        %v1391 = vsel %vm255, %v1390, %v1353
        %v1392 = vrot.slane %v1353, 4
        %v1393 = vsel %vm255, %v1377, %v1392
        %v1394 = vrot.slane %v1103, 4
        %v1395 = vsel %vm255, %v1394, %v1079
        %v1396 = vrot.slane %v1079, 4
        %v1397 = vsel %vm255, %v1103, %v1396
        %v1399 = vunpack.c.l.s4 1983009808
        %v1400 = vunpack.c.0.s8 %v1399
        %v1401 = vperm.slane %v1395, %v1400
        %v1403 = vunpack.c.l.s4 1983009808
        %v1404 = vunpack.c.0.s8 %v1403
        %v1405 = vperm.slane %v1397, %v1404
        %v1406 = vrot.slane %v1115, 4
        %v1407 = vsel %vm255, %v1406, %v1091
        %v1408 = vrot.slane %v1091, 4
        %v1409 = vsel %vm255, %v1115, %v1408
        %v1411 = vunpack.c.l.s4 1983009808
        %v1412 = vunpack.c.0.s8 %v1411
        %v1413 = vperm.slane %v1407, %v1412
        %v1415 = vunpack.c.l.s4 1983009808
        %v1416 = vunpack.c.0.s8 %v1415
        %v1417 = vperm.slane %v1409, %v1416
        %v1418 = vrot.slane %v1151, 4
        %v1419 = vsel %vm255, %v1418, %v1127
        %v1420 = vrot.slane %v1127, 4
        %v1421 = vsel %vm255, %v1151, %v1420
        %v1423 = vunpack.c.l.s4 1983009808
        %v1424 = vunpack.c.0.s8 %v1423
        %v1425 = vperm.slane %v1419, %v1424
        %v1427 = vunpack.c.l.s4 1983009808
        %v1428 = vunpack.c.0.s8 %v1427
        %v1429 = vperm.slane %v1421, %v1428
        %v1430 = vrot.slane %v1163, 4
        %v1431 = vsel %vm255, %v1430, %v1139
        %v1432 = vrot.slane %v1139, 4
        %v1433 = vsel %vm255, %v1163, %v1432
        %v1435 = vunpack.c.l.s4 1983009808
        %v1436 = vunpack.c.0.s8 %v1435
        %v1437 = vperm.slane %v1431, %v1436
        %v1439 = vunpack.c.l.s4 1983009808
        %v1440 = vunpack.c.0.s8 %v1439
        %v1441 = vperm.slane %v1433, %v1440
        %v1442 = vrot.slane %v1413, 4
        %v1443 = vsel %vm255, %v1442, %v1401
        %v1444 = vrot.slane %v1401, 4
        %v1445 = vsel %vm255, %v1413, %v1444
        %v1447 = vunpack.c.l.s4 1934713408
        %v1448 = vunpack.c.0.s8 %v1447
        %v1449 = vperm.slane %v1443, %v1448
        %v1451 = vunpack.c.l.s4 1934713408
        %v1452 = vunpack.c.0.s8 %v1451
        %v1453 = vperm.slane %v1445, %v1452
        %v1454 = vrot.slane %v1417, 4
        %v1455 = vsel %vm255, %v1454, %v1405
        %v1456 = vrot.slane %v1405, 4
        %v1457 = vsel %vm255, %v1417, %v1456
        %v1459 = vunpack.c.l.s4 1934713408
        %v1460 = vunpack.c.0.s8 %v1459
        %v1461 = vperm.slane %v1455, %v1460
        %v1463 = vunpack.c.l.s4 1934713408
        %v1464 = vunpack.c.0.s8 %v1463
        %v1465 = vperm.slane %v1457, %v1464
        %v1466 = vrot.slane %v1437, 4
        %v1467 = vsel %vm255, %v1466, %v1425
        %v1468 = vrot.slane %v1425, 4
        %v1469 = vsel %vm255, %v1437, %v1468
        %v1471 = vunpack.c.l.s4 1934713408
        %v1472 = vunpack.c.0.s8 %v1471
        %v1473 = vperm.slane %v1467, %v1472
        %v1475 = vunpack.c.l.s4 1934713408
        %v1476 = vunpack.c.0.s8 %v1475
        %v1477 = vperm.slane %v1469, %v1476
        %v1478 = vrot.slane %v1441, 4
        %v1479 = vsel %vm255, %v1478, %v1429
        %v1480 = vrot.slane %v1429, 4
        %v1481 = vsel %vm255, %v1441, %v1480
        %v1483 = vunpack.c.l.s4 1934713408
        %v1484 = vunpack.c.0.s8 %v1483
        %v1485 = vperm.slane %v1479, %v1484
        %v1487 = vunpack.c.l.s4 1934713408
        %v1488 = vunpack.c.0.s8 %v1487
        %v1489 = vperm.slane %v1481, %v1488
        %v1490 = vrot.slane %v1473, 4
        %v1491 = vsel %vm255, %v1490, %v1449
        %v1492 = vrot.slane %v1449, 4
        %v1493 = vsel %vm255, %v1473, %v1492
        %v1494 = vrot.slane %v1477, 4
        %v1495 = vsel %vm255, %v1494, %v1453
        %v1496 = vrot.slane %v1453, 4
        %v1497 = vsel %vm255, %v1477, %v1496
        %v1498 = vrot.slane %v1485, 4
        %v1499 = vsel %vm255, %v1498, %v1461
        %v1500 = vrot.slane %v1461, 4
        %v1501 = vsel %vm255, %v1485, %v1500
        %v1502 = vrot.slane %v1489, 4
        %v1503 = vsel %vm255, %v1502, %v1465
        %v1504 = vrot.slane %v1465, 4
        %v1505 = vsel %vm255, %v1489, %v1504
        %v1506 = vrot.slane %v1105, 4
        %v1507 = vsel %vm255, %v1506, %v1081
        %v1508 = vrot.slane %v1081, 4
        %v1509 = vsel %vm255, %v1105, %v1508
        %v1511 = vunpack.c.l.s4 1983009808
        %v1512 = vunpack.c.0.s8 %v1511
        %v1513 = vperm.slane %v1507, %v1512
        %v1515 = vunpack.c.l.s4 1983009808
        %v1516 = vunpack.c.0.s8 %v1515
        %v1517 = vperm.slane %v1509, %v1516
        %v1518 = vrot.slane %v1117, 4
        %v1519 = vsel %vm255, %v1518, %v1093
        %v1520 = vrot.slane %v1093, 4
        %v1521 = vsel %vm255, %v1117, %v1520
        %v1523 = vunpack.c.l.s4 1983009808
        %v1524 = vunpack.c.0.s8 %v1523
        %v1525 = vperm.slane %v1519, %v1524
        %v1527 = vunpack.c.l.s4 1983009808
        %v1528 = vunpack.c.0.s8 %v1527
        %v1529 = vperm.slane %v1521, %v1528
        %v1530 = vrot.slane %v1153, 4
        %v1531 = vsel %vm255, %v1530, %v1129
        %v1532 = vrot.slane %v1129, 4
        %v1533 = vsel %vm255, %v1153, %v1532
        %v1535 = vunpack.c.l.s4 1983009808
        %v1536 = vunpack.c.0.s8 %v1535
        %v1537 = vperm.slane %v1531, %v1536
        %v1539 = vunpack.c.l.s4 1983009808
        %v1540 = vunpack.c.0.s8 %v1539
        %v1541 = vperm.slane %v1533, %v1540
        %v1542 = vrot.slane %v1165, 4
        %v1543 = vsel %vm255, %v1542, %v1141
        %v1544 = vrot.slane %v1141, 4
        %v1545 = vsel %vm255, %v1165, %v1544
        %v1547 = vunpack.c.l.s4 1983009808
        %v1548 = vunpack.c.0.s8 %v1547
        %v1549 = vperm.slane %v1543, %v1548
        %v1551 = vunpack.c.l.s4 1983009808
        %v1552 = vunpack.c.0.s8 %v1551
        %v1553 = vperm.slane %v1545, %v1552
        %v1554 = vrot.slane %v1525, 4
        %v1555 = vsel %vm255, %v1554, %v1513
        %v1556 = vrot.slane %v1513, 4
        %v1557 = vsel %vm255, %v1525, %v1556
        %v1559 = vunpack.c.l.s4 1934713408
        %v1560 = vunpack.c.0.s8 %v1559
        %v1561 = vperm.slane %v1555, %v1560
        %v1563 = vunpack.c.l.s4 1934713408
        %v1564 = vunpack.c.0.s8 %v1563
        %v1565 = vperm.slane %v1557, %v1564
        %v1566 = vrot.slane %v1529, 4
        %v1567 = vsel %vm255, %v1566, %v1517
        %v1568 = vrot.slane %v1517, 4
        %v1569 = vsel %vm255, %v1529, %v1568
        %v1571 = vunpack.c.l.s4 1934713408
        %v1572 = vunpack.c.0.s8 %v1571
        %v1573 = vperm.slane %v1567, %v1572
        %v1575 = vunpack.c.l.s4 1934713408
        %v1576 = vunpack.c.0.s8 %v1575
        %v1577 = vperm.slane %v1569, %v1576
        %v1578 = vrot.slane %v1549, 4
        %v1579 = vsel %vm255, %v1578, %v1537
        %v1580 = vrot.slane %v1537, 4
        %v1581 = vsel %vm255, %v1549, %v1580
        %v1583 = vunpack.c.l.s4 1934713408
        %v1584 = vunpack.c.0.s8 %v1583
        %v1585 = vperm.slane %v1579, %v1584
        %v1587 = vunpack.c.l.s4 1934713408
        %v1588 = vunpack.c.0.s8 %v1587
        %v1589 = vperm.slane %v1581, %v1588
        %v1590 = vrot.slane %v1553, 4
        %v1591 = vsel %vm255, %v1590, %v1541
        %v1592 = vrot.slane %v1541, 4
        %v1593 = vsel %vm255, %v1553, %v1592
        %v1595 = vunpack.c.l.s4 1934713408
        %v1596 = vunpack.c.0.s8 %v1595
        %v1597 = vperm.slane %v1591, %v1596
        %v1599 = vunpack.c.l.s4 1934713408
        %v1600 = vunpack.c.0.s8 %v1599
        %v1601 = vperm.slane %v1593, %v1600
        %v1602 = vrot.slane %v1585, 4
        %v1603 = vsel %vm255, %v1602, %v1561
        %v1604 = vrot.slane %v1561, 4
        %v1605 = vsel %vm255, %v1585, %v1604
        %v1606 = vrot.slane %v1589, 4
        %v1607 = vsel %vm255, %v1606, %v1565
        %v1608 = vrot.slane %v1565, 4
        %v1609 = vsel %vm255, %v1589, %v1608
        %v1610 = vrot.slane %v1597, 4
        %v1611 = vsel %vm255, %v1610, %v1573
        %v1612 = vrot.slane %v1573, 4
        %v1613 = vsel %vm255, %v1597, %v1612
        %v1614 = vrot.slane %v1601, 4
        %v1615 = vsel %vm255, %v1614, %v1577
        %v1616 = vrot.slane %v1577, 4
        %v1617 = vsel %vm255, %v1601, %v1616
        %1650 = vset.pattern.permute.xlu0 0
        %1651 = vperm.xlu0 %1650, %v1267
        %v1652 = vpop.permute.xlu0 %1651
        %1653 = vset.pattern.permute.xlu0 0
        %1654 = vperm.xlu0 %1653, %v1269
        %v1655 = vpop.permute.xlu0 %1654
        %1656 = vset.pattern.permute.xlu0 0
        %1657 = vperm.xlu0 %1656, %v1271
        %v1658 = vpop.permute.xlu0 %1657
        %1659 = vset.pattern.permute.xlu0 0
        %1660 = vperm.xlu0 %1659, %v1273
        %v1661 = vpop.permute.xlu0 %1660
        %1662 = vset.pattern.permute.xlu0 0
        %1663 = vperm.xlu0 %1662, %v1275
        %v1664 = vpop.permute.xlu0 %1663
        %1665 = vset.pattern.permute.xlu0 0
        %1666 = vperm.xlu0 %1665, %v1277
        %v1667 = vpop.permute.xlu0 %1666
        %1668 = vset.pattern.permute.xlu0 0
        %1669 = vperm.xlu0 %1668, %v1279
        %v1670 = vpop.permute.xlu0 %1669
        %1671 = vset.pattern.permute.xlu0 0
        %1672 = vperm.xlu0 %1671, %v1281
        %v1673 = vpop.permute.xlu0 %1672
        %1674 = vset.pattern.permute.xlu0 0
        %1675 = vperm.xlu0 %1674, %v1379
        %v1676 = vpop.permute.xlu0 %1675
        %1677 = vset.pattern.permute.xlu0 0
        %1678 = vperm.xlu0 %1677, %v1381
        %v1679 = vpop.permute.xlu0 %1678
        %1680 = vset.pattern.permute.xlu0 0
        %1681 = vperm.xlu0 %1680, %v1383
        %v1682 = vpop.permute.xlu0 %1681
        %1683 = vset.pattern.permute.xlu0 0
        %1684 = vperm.xlu0 %1683, %v1385
        %v1685 = vpop.permute.xlu0 %1684
        %1686 = vset.pattern.permute.xlu0 0
        %1687 = vperm.xlu0 %1686, %v1387
        %v1688 = vpop.permute.xlu0 %1687
        %1689 = vset.pattern.permute.xlu0 0
        %1690 = vperm.xlu0 %1689, %v1389
        %v1691 = vpop.permute.xlu0 %1690
        %1692 = vset.pattern.permute.xlu0 0
        %1693 = vperm.xlu0 %1692, %v1391
        %v1694 = vpop.permute.xlu0 %1693
        %1695 = vset.pattern.permute.xlu0 0
        %1696 = vperm.xlu0 %1695, %v1393
        %v1697 = vpop.permute.xlu0 %1696
        %1698 = vset.pattern.permute.xlu0 0
        %1699 = vperm.xlu0 %1698, %v1491
        %v1700 = vpop.permute.xlu0 %1699
        %1701 = vset.pattern.permute.xlu0 0
        %1702 = vperm.xlu0 %1701, %v1493
        %v1703 = vpop.permute.xlu0 %1702
        %1704 = vset.pattern.permute.xlu0 0
        %1705 = vperm.xlu0 %1704, %v1495
        %v1706 = vpop.permute.xlu0 %1705
        %1707 = vset.pattern.permute.xlu0 0
        %1708 = vperm.xlu0 %1707, %v1497
        %v1709 = vpop.permute.xlu0 %1708
        %1710 = vset.pattern.permute.xlu0 0
        %1711 = vperm.xlu0 %1710, %v1499
        %v1712 = vpop.permute.xlu0 %1711
        %1713 = vset.pattern.permute.xlu0 0
        %1714 = vperm.xlu0 %1713, %v1501
        %v1715 = vpop.permute.xlu0 %1714
        %1716 = vset.pattern.permute.xlu0 0
        %1717 = vperm.xlu0 %1716, %v1503
        %v1718 = vpop.permute.xlu0 %1717
        %1719 = vset.pattern.permute.xlu0 0
        %1720 = vperm.xlu0 %1719, %v1505
        %v1721 = vpop.permute.xlu0 %1720
        %1722 = vset.pattern.permute.xlu0 0
        %1723 = vperm.xlu0 %1722, %v1603
        %v1724 = vpop.permute.xlu0 %1723
        %1725 = vset.pattern.permute.xlu0 0
        %1726 = vperm.xlu0 %1725, %v1605
        %v1727 = vpop.permute.xlu0 %1726
        %1728 = vset.pattern.permute.xlu0 0
        %1729 = vperm.xlu0 %1728, %v1607
        %v1730 = vpop.permute.xlu0 %1729
        %1731 = vset.pattern.permute.xlu0 0
        %1732 = vperm.xlu0 %1731, %v1609
        %v1733 = vpop.permute.xlu0 %1732
        %1734 = vset.pattern.permute.xlu0 0
        %1735 = vperm.xlu0 %1734, %v1611
        %v1736 = vpop.permute.xlu0 %1735
        %1737 = vset.pattern.permute.xlu0 0
        %1738 = vperm.xlu0 %1737, %v1613
        %v1739 = vpop.permute.xlu0 %1738
        %1740 = vset.pattern.permute.xlu0 0
        %1741 = vperm.xlu0 %1740, %v1615
        %v1742 = vpop.permute.xlu0 %1741
        %1743 = vset.pattern.permute.xlu0 0
        %1744 = vperm.xlu0 %1743, %v1617
        %v1745 = vpop.permute.xlu0 %1744
        %v1746 = vperm.slane %v1652, %v832
        %v1747 = vperm.slane %v1655, %v832
        %v1748 = vperm.slane %v1658, %v832
        %v1749 = vperm.slane %v1661, %v832
        %v1750 = vperm.slane %v1664, %v832
        %v1751 = vperm.slane %v1667, %v832
        %v1752 = vperm.slane %v1670, %v832
        %v1753 = vperm.slane %v1673, %v832
        %v1754 = vperm.slane %v1676, %v832
        %v1755 = vperm.slane %v1679, %v832
        %v1756 = vperm.slane %v1682, %v832
        %v1757 = vperm.slane %v1685, %v832
        %v1758 = vperm.slane %v1688, %v832
        %v1759 = vperm.slane %v1691, %v832
        %v1760 = vperm.slane %v1694, %v832
        %v1761 = vperm.slane %v1697, %v832
        %v1762 = vperm.slane %v1700, %v832
        %v1763 = vperm.slane %v1703, %v832
        %v1764 = vperm.slane %v1706, %v832
        %v1765 = vperm.slane %v1709, %v832
        %v1766 = vperm.slane %v1712, %v832
        %v1767 = vperm.slane %v1715, %v832
        %v1768 = vperm.slane %v1718, %v832
        %v1769 = vperm.slane %v1721, %v832
        %v1770 = vperm.slane %v1724, %v832
        %v1771 = vperm.slane %v1727, %v832
        %v1772 = vperm.slane %v1730, %v832
        %v1773 = vperm.slane %v1733, %v832
        %v1774 = vperm.slane %v1736, %v832
        %v1775 = vperm.slane %v1739, %v832
        %v1776 = vperm.slane %v1742, %v832
        %v1777 = vperm.slane %v1745, %v832
        %v1778 = vsel %vm865, %v1747, %v1746
        %v1779 = vsel %vm867, %v1748, %v1778
        %v1780 = vsel %vm869, %v1749, %v1779
        %v1781 = vsel %vm871, %v1750, %v1780
        %v1782 = vsel %vm873, %v1751, %v1781
        %v1783 = vsel %vm875, %v1752, %v1782
        %v1784 = vsel %vm877, %v1753, %v1783
        %v1785 = vsel %vm865, %v1755, %v1754
        %v1786 = vsel %vm867, %v1756, %v1785
        %v1787 = vsel %vm869, %v1757, %v1786
        %v1788 = vsel %vm871, %v1758, %v1787
        %v1789 = vsel %vm873, %v1759, %v1788
        %v1790 = vsel %vm875, %v1760, %v1789
        %v1791 = vsel %vm877, %v1761, %v1790
        %v1792 = vsel %vm865, %v1763, %v1762
        %v1793 = vsel %vm867, %v1764, %v1792
        %v1794 = vsel %vm869, %v1765, %v1793
        %v1795 = vsel %vm871, %v1766, %v1794
        %v1796 = vsel %vm873, %v1767, %v1795
        %v1797 = vsel %vm875, %v1768, %v1796
        %v1798 = vsel %vm877, %v1769, %v1797
        %v1799 = vsel %vm865, %v1771, %v1770
        %v1800 = vsel %vm867, %v1772, %v1799
        %v1801 = vsel %vm869, %v1773, %v1800
        %v1802 = vsel %vm871, %v1774, %v1801
        %v1803 = vsel %vm873, %v1775, %v1802
        %v1804 = vsel %vm875, %v1776, %v1803
        %v1805 = vsel %vm877, %v1777, %v1804
        %s1810 = scalar_lea.vmem %s155, 16 [#allocation5]
        %1811 = vst.msk [vmem:[%s1810] sm:$0xff] %vm904, %v1784
        %1812 = vst.msk [vmem:[%s1810 + $0x20] sm:$0xff] %vm904, %v1791
        %1813 = vst.msk [vmem:[%s1810 + $0x40] sm:$0xff] %vm904, %v1798
        %1814 = vst.msk [vmem:[%s1810 + $0x60] sm:$0xff] %vm904, %v1805
        %1815 = vset.pattern.permute.xlu0 1
        %1816 = vperm.xlu0 %1815, %v1267
        %v1817 = vpop.permute.xlu0 %1816
        %1818 = vset.pattern.permute.xlu0 1
        %1819 = vperm.xlu0 %1818, %v1269
        %v1820 = vpop.permute.xlu0 %1819
        %1821 = vset.pattern.permute.xlu0 1
        %1822 = vperm.xlu0 %1821, %v1271
        %v1823 = vpop.permute.xlu0 %1822
        %1824 = vset.pattern.permute.xlu0 1
        %1825 = vperm.xlu0 %1824, %v1273
        %v1826 = vpop.permute.xlu0 %1825
        %1827 = vset.pattern.permute.xlu0 1
        %1828 = vperm.xlu0 %1827, %v1275
        %v1829 = vpop.permute.xlu0 %1828
        %1830 = vset.pattern.permute.xlu0 1
        %1831 = vperm.xlu0 %1830, %v1277
        %v1832 = vpop.permute.xlu0 %1831
        %1833 = vset.pattern.permute.xlu0 1
        %1834 = vperm.xlu0 %1833, %v1279
        %v1835 = vpop.permute.xlu0 %1834
        %1836 = vset.pattern.permute.xlu0 1
        %1837 = vperm.xlu0 %1836, %v1281
        %v1838 = vpop.permute.xlu0 %1837
        %1839 = vset.pattern.permute.xlu0 1
        %1840 = vperm.xlu0 %1839, %v1379
        %v1841 = vpop.permute.xlu0 %1840
        %1842 = vset.pattern.permute.xlu0 1
        %1843 = vperm.xlu0 %1842, %v1381
        %v1844 = vpop.permute.xlu0 %1843
        %1845 = vset.pattern.permute.xlu0 1
        %1846 = vperm.xlu0 %1845, %v1383
        %v1847 = vpop.permute.xlu0 %1846
        %1848 = vset.pattern.permute.xlu0 1
        %1849 = vperm.xlu0 %1848, %v1385
        %v1850 = vpop.permute.xlu0 %1849
        %1851 = vset.pattern.permute.xlu0 1
        %1852 = vperm.xlu0 %1851, %v1387
        %v1853 = vpop.permute.xlu0 %1852
        %1854 = vset.pattern.permute.xlu0 1
        %1855 = vperm.xlu0 %1854, %v1389
        %v1856 = vpop.permute.xlu0 %1855
        %1857 = vset.pattern.permute.xlu0 1
        %1858 = vperm.xlu0 %1857, %v1391
        %v1859 = vpop.permute.xlu0 %1858
        %1860 = vset.pattern.permute.xlu0 1
        %1861 = vperm.xlu0 %1860, %v1393
        %v1862 = vpop.permute.xlu0 %1861
        %1863 = vset.pattern.permute.xlu0 1
        %1864 = vperm.xlu0 %1863, %v1491
        %v1865 = vpop.permute.xlu0 %1864
        %1866 = vset.pattern.permute.xlu0 1
        %1867 = vperm.xlu0 %1866, %v1493
        %v1868 = vpop.permute.xlu0 %1867
        %1869 = vset.pattern.permute.xlu0 1
        %1870 = vperm.xlu0 %1869, %v1495
        %v1871 = vpop.permute.xlu0 %1870
        %1872 = vset.pattern.permute.xlu0 1
        %1873 = vperm.xlu0 %1872, %v1497
        %v1874 = vpop.permute.xlu0 %1873
        %1875 = vset.pattern.permute.xlu0 1
        %1876 = vperm.xlu0 %1875, %v1499
        %v1877 = vpop.permute.xlu0 %1876
        %1878 = vset.pattern.permute.xlu0 1
        %1879 = vperm.xlu0 %1878, %v1501
        %v1880 = vpop.permute.xlu0 %1879
        %1881 = vset.pattern.permute.xlu0 1
        %1882 = vperm.xlu0 %1881, %v1503
        %v1883 = vpop.permute.xlu0 %1882
        %1884 = vset.pattern.permute.xlu0 1
        %1885 = vperm.xlu0 %1884, %v1505
        %v1886 = vpop.permute.xlu0 %1885
        %1887 = vset.pattern.permute.xlu0 1
        %1888 = vperm.xlu0 %1887, %v1603
        %v1889 = vpop.permute.xlu0 %1888
        %1890 = vset.pattern.permute.xlu0 1
        %1891 = vperm.xlu0 %1890, %v1605
        %v1892 = vpop.permute.xlu0 %1891
        %1893 = vset.pattern.permute.xlu0 1
        %1894 = vperm.xlu0 %1893, %v1607
        %v1895 = vpop.permute.xlu0 %1894
        %1896 = vset.pattern.permute.xlu0 1
        %1897 = vperm.xlu0 %1896, %v1609
        %v1898 = vpop.permute.xlu0 %1897
        %1899 = vset.pattern.permute.xlu0 1
        %1900 = vperm.xlu0 %1899, %v1611
        %v1901 = vpop.permute.xlu0 %1900
        %1902 = vset.pattern.permute.xlu0 1
        %1903 = vperm.xlu0 %1902, %v1613
        %v1904 = vpop.permute.xlu0 %1903
        %1905 = vset.pattern.permute.xlu0 1
        %1906 = vperm.xlu0 %1905, %v1615
        %v1907 = vpop.permute.xlu0 %1906
        %1908 = vset.pattern.permute.xlu0 1
        %1909 = vperm.xlu0 %1908, %v1617
        %v1910 = vpop.permute.xlu0 %1909
        %v1911 = vperm.slane %v1817, %v832
        %v1912 = vperm.slane %v1820, %v832
        %v1913 = vperm.slane %v1823, %v832
        %v1914 = vperm.slane %v1826, %v832
        %v1915 = vperm.slane %v1829, %v832
        %v1916 = vperm.slane %v1832, %v832
        %v1917 = vperm.slane %v1835, %v832
        %v1918 = vperm.slane %v1838, %v832
        %v1919 = vperm.slane %v1841, %v832
        %v1920 = vperm.slane %v1844, %v832
        %v1921 = vperm.slane %v1847, %v832
        %v1922 = vperm.slane %v1850, %v832
        %v1923 = vperm.slane %v1853, %v832
        %v1924 = vperm.slane %v1856, %v832
        %v1925 = vperm.slane %v1859, %v832
        %v1926 = vperm.slane %v1862, %v832
        %v1927 = vperm.slane %v1865, %v832
        %v1928 = vperm.slane %v1868, %v832
        %v1929 = vperm.slane %v1871, %v832
        %v1930 = vperm.slane %v1874, %v832
        %v1931 = vperm.slane %v1877, %v832
        %v1932 = vperm.slane %v1880, %v832
        %v1933 = vperm.slane %v1883, %v832
        %v1934 = vperm.slane %v1886, %v832
        %v1935 = vperm.slane %v1889, %v832
        %v1936 = vperm.slane %v1892, %v832
        %v1937 = vperm.slane %v1895, %v832
        %v1938 = vperm.slane %v1898, %v832
        %v1939 = vperm.slane %v1901, %v832
        %v1940 = vperm.slane %v1904, %v832
        %v1941 = vperm.slane %v1907, %v832
        %v1942 = vperm.slane %v1910, %v832
        %v1943 = vsel %vm865, %v1912, %v1911
        %v1944 = vsel %vm867, %v1913, %v1943
        %v1945 = vsel %vm869, %v1914, %v1944
        %v1946 = vsel %vm871, %v1915, %v1945
        %v1947 = vsel %vm873, %v1916, %v1946
        %v1948 = vsel %vm875, %v1917, %v1947
        %v1949 = vsel %vm877, %v1918, %v1948
        %v1950 = vsel %vm865, %v1920, %v1919
        %v1951 = vsel %vm867, %v1921, %v1950
        %v1952 = vsel %vm869, %v1922, %v1951
        %v1953 = vsel %vm871, %v1923, %v1952
        %v1954 = vsel %vm873, %v1924, %v1953
        %v1955 = vsel %vm875, %v1925, %v1954
        %v1956 = vsel %vm877, %v1926, %v1955
        %v1957 = vsel %vm865, %v1928, %v1927
        %v1958 = vsel %vm867, %v1929, %v1957
        %v1959 = vsel %vm869, %v1930, %v1958
        %v1960 = vsel %vm871, %v1931, %v1959
        %v1961 = vsel %vm873, %v1932, %v1960
        %v1962 = vsel %vm875, %v1933, %v1961
        %v1963 = vsel %vm877, %v1934, %v1962
        %v1964 = vsel %vm865, %v1936, %v1935
        %v1965 = vsel %vm867, %v1937, %v1964
        %v1966 = vsel %vm869, %v1938, %v1965
        %v1967 = vsel %vm871, %v1939, %v1966
        %v1968 = vsel %vm873, %v1940, %v1967
        %v1969 = vsel %vm875, %v1941, %v1968
        %v1970 = vsel %vm877, %v1942, %v1969
        %s1975 = scalar_lea.vmem %s155, 24 [#allocation5]
        %1976 = vst.msk [vmem:[%s1975] sm:$0xff] %vm904, %v1949
        %1977 = vst.msk [vmem:[%s1975 + $0x20] sm:$0xff] %vm904, %v1956
        %1978 = vst.msk [vmem:[%s1975 + $0x40] sm:$0xff] %vm904, %v1963
        %1979 = vst.msk [vmem:[%s1975 + $0x60] sm:$0xff] %vm904, %v1970
        %s1980 = sand.u32 %s68, 1
        %s1981 = scalar_lea.sflag [#allocation4], %s1980
        %s1982 = sand.u32 %s68, 1
        %s1983 = smul.addr %s1982, 128
        %s1984 = scalar_lea.vmem [#allocation5], %s1983
        // Predicated region
        $region29: #{tpu_custom_call.1} parent=23 // pred_check
          %p1985 = pneg %p78
        $region30: #{tpu_custom_call.1} parent=23 // pred_check_branch
          %1987 = sbr.rel (%p1985) target = $region32
        $region31: #{tpu_custom_call.1} parent=23 // pred_region
          %s1988 = smul.u32 4, %s22
          %1990 = vsyncadd %s1981, 0
          %s1991 = smul.addr %s1988, 4
          %s1992 = sadd.s32 %s23, %s1991
          %s1993 = smul.addr %s1992, 8
          %s1994 = scalar_lea.hbm %s1, %s1993
          %s1995 = sshll.u32 %s1984, 4
          %s1996 = int_to_ptr.vmem [resolvable:$true] %s1995
          %s1997 = sshll.u32 %s1994, 4
          %s1998 = int_to_ptr.hbm [resolvable:$true] %s1997
          %2003 = dma.vmem_to_hbm [thread:$0]  %s1996, 2048, %s1998, %s1981, 128, 128, 8
        $region32: #{tpu_custom_call.1} parent=23 // pred_fallthru
          _
      $region24: #{tpu_custom_call.1} parent=5 // pred_fallthru
        _
      %p2004 = scmp.le.s32.totalorder 2, %s13
      // Predicated region
      $region33: #{tpu_custom_call.1} parent=5 // pred_check
        %p2005 = pneg %p2004
      $region34: #{tpu_custom_call.1} parent=5 // pred_check_branch
        %2007 = sbr.rel (%p2005) target = $region36
      $region35: #{tpu_custom_call.1} parent=5 // pred_region
        %s2008 = ssub.s32 %s13, 2
        // Predicated region
        $region37: #{tpu_custom_call.1} parent=35 // pred_check
          %p2009 = pneg %p84
        $region38: #{tpu_custom_call.1} parent=35 // pred_check_branch
          %2011 = sbr.rel (%p2009) target = $region40
        $region39: #{tpu_custom_call.1} parent=35 // pred_region
          %s2012 = sand.u32 %s69, 1
          %s2013 = scalar_lea.sflag [#allocation4], %s2012
          %s2014 = sand.u32 %s69, 1
          %s2015 = smul.addr %s2014, 128
          %s2016 = scalar_lea.vmem [#allocation5], %s2015
          %2018 = dma.done %s2013, 2048
        $region40: #{tpu_custom_call.1} parent=35 // pred_fallthru
          _
      $region36: #{tpu_custom_call.1} parent=5 // pred_fallthru
        _
    $region6: #{tpu_custom_call.1} parent=1 // loop_footer
      %s17 = sadd.s32 1, %s13
    $region7: #{tpu_custom_call.1} parent=1 // loop_footer_branch
      %12 = sbr.rel target = $region3
    $region8: #{tpu_custom_call.1} parent=1 // loop_exit
      _
    %2019 = vsyncpa [#allocation3], 1
    %s2020 = scalar_lea.sflag [#allocation3], 1
    %2021 = vsyncpa %s2020, 1
    %2022 = vsyncpa [#allocation4], 1
    %s2023 = scalar_lea.sflag [#allocation4], 1
    %2024 = vsyncpa %s2023, 1

</llo_original>
